<compile_context>
chip_gen: v7x
topology: tpu7x:2x2x1
jax: 0.10.0
libtpu: 0.0.40
codegen_flags: <defaults>
</compile_context>

<pallas_src>
import functools
import math

import jax
import jax.numpy as jnp
from jax.experimental import pallas as pl
from jax.experimental.pallas import tpu as pltpu


def _round_up(x, m):
    return ((x + m - 1) // m) * m


def _gru_kernel(x_ref, h0_ref, wzr_ref, wc_ref, out_ref, h_scratch, *, T, Lp):
    """One grid step = T timesteps of the recurrence.

    x_ref:   (T, Bp, 3*Lp) f32  -- precomputed x-side projections [z | r | cand]
    h0_ref:  (Bp, Lp)      f32
    wzr_ref: (Lp, 2*Lp)    weight dtype -- fused h-side weights for z and r
    wc_ref:  (Lp, Lp)      weight dtype -- h-side weight for candidate
    out_ref: (T, Bp, Lp)   f32
    h_scratch: (Bp, Lp)    f32  -- hidden state carried across grid steps
    """
    # Initialize the carried hidden state on the first time block.
    @pl.when(pl.program_id(0) == 0)
    def _():
        h_scratch[...] = h0_ref[...]

    wzr = wzr_ref[...]
    wc = wc_ref[...]
    wdt = wzr.dtype

    def step(tl, h):
        xblk = x_ref[tl]                                        # (Bp, 3*Lp) f32

        # z_t, r_t from one fused matmul: h @ [Wz_h^T | Wr_h^T]  (+ hoisted x part)
        hzr = jnp.dot(h.astype(wdt), wzr, preferred_element_type=jnp.float32)
        z = jax.nn.sigmoid(hzr[:, :Lp] + xblk[:, :Lp])
        r = jax.nn.sigmoid(hzr[:, Lp:] + xblk[:, Lp:2 * Lp])

        # candidate = tanh((r*h) @ W_h^T + x-side part)
        cand = jnp.tanh(
            jnp.dot((r * h).astype(wdt), wc, preferred_element_type=jnp.float32)
            + xblk[:, 2 * Lp:])

        # h_t = (1 - z) * h + z * candidate   (exactly as in the PyTorch one_step)
        h_new = (1.0 - z) * h + z * cand
        out_ref[tl] = h_new.astype(out_ref.dtype)
        return h_new

    h_final = jax.lax.fori_loop(0, T, step, h_scratch[...], unroll=True)
    h_scratch[...] = h_final


def gru_forward(X, h0, params, *, weight_dtype=jnp.float32, time_block=None):
    """X: (S, B) int32 token ids; h0: (B, L) f32. Returns H: (S, B, L) f32."""
    emb = params["embedding"]                     # (V, D)
    S, B = X.shape
    L = h0.shape[1]

    # Lane/sublane-dense padding: batch -> multiple of 8, latent -> multiple of 128.
    Bp = _round_up(B, 8)
    Lp = _round_up(L, 128)

    # ---- Glue (plain JAX): embedding gather + hoisted x-side projections -----
    x_emb = jnp.take(emb, X, axis=0).astype(jnp.float32)          # (S, B, D)
    # nn.Linear(L+D, L, bias=False): y = cat(h, x) @ W.T with W: (L, L+D).
    w_x_all = jnp.concatenate(
        [params["w_z"][:, L:], params["w_r"][:, L:], params["w"][:, L:]], axis=0)  # (3L, D)
    x_proj = jnp.einsum("sbd,gd->sbg", x_emb, w_x_all)            # (S, B, 3L)

    # Pad each L-wide chunk independently so kernel-side slices are Lp-aligned.
    xz, xr, xc = jnp.split(x_proj, 3, axis=-1)
    pad_bl = lambda a: jnp.pad(a, ((0, 0), (0, Bp - B), (0, Lp - L)))
    x_proj_p = jnp.concatenate([pad_bl(xz), pad_bl(xr), pad_bl(xc)], axis=-1)  # (S, Bp, 3Lp)

    # h-side weights: transpose, zero-pad, fuse z & r into one operand.
    pad_ll = lambda w: jnp.pad(w[:, :L].T, ((0, Lp - L), (0, Lp - L)))  # (Lp, Lp)
    w_zr_h = jnp.concatenate(
        [pad_ll(params["w_z"]), pad_ll(params["w_r"])], axis=1).astype(weight_dtype)  # (Lp, 2Lp)
    w_c_h = pad_ll(params["w"]).astype(weight_dtype)                                   # (Lp, Lp)

    h0_p = jnp.pad(h0.astype(jnp.float32), ((0, Bp - B), (0, Lp - L)))  # (Bp, Lp)

    # ---- Time blocking ----
    if time_block is None:
        time_block = 1
        for cand in range(min(S, 32), 0, -1):
            if S % cand == 0:
                time_block = cand
                break
    T = time_block
    assert S % T == 0, "time_block must divide seq_len"
    n_tblocks = S // T

    # ---- VMEM budget: weights + double-buffered blocks + scratch, with headroom.
    wbytes = jnp.dtype(weight_dtype).itemsize
    need = (2 * T * Bp * 3 * Lp * 4        # x_proj blocks (double-buffered)
            + 2 * T * Bp * Lp * 4          # output blocks
            + 2 * (Lp * 2 * Lp + Lp * Lp) * wbytes   # gate weights
            + 2 * Bp * Lp * 4              # h0
            + Bp * Lp * 4)                 # h scratch
    vmem_bytes = int(min(max(4 * need, 16 * 1024 * 1024), 64 * 1024 * 1024))

    kernel = functools.partial(_gru_kernel, T=T, Lp=Lp)
    full2d = lambda shape: pl.BlockSpec(shape, lambda tb: (0, 0))

    H_p = pl.pallas_call(
        kernel,
        out_shape=jax.ShapeDtypeStruct((S, Bp, Lp), jnp.float32),
        grid_spec=pltpu.PrefetchScalarGridSpec(
            num_scalar_prefetch=0,
            grid=(n_tblocks,),
            in_specs=[
                pl.BlockSpec((T, Bp, 3 * Lp), lambda tb: (tb, 0, 0)),  # X_proj slab
                full2d((Bp, Lp)),                                      # h0
                full2d((Lp, 2 * Lp)),                                  # fused z/r weights
                full2d((Lp, Lp)),                                      # candidate weights
            ],
            out_specs=pl.BlockSpec((T, Bp, Lp), lambda tb: (tb, 0, 0)),
            scratch_shapes=[pltpu.VMEM((Bp, Lp), jnp.float32)],
        ),
        compiler_params=pltpu.CompilerParams(
            dimension_semantics=("arbitrary",),      # sequential recurrence
            vmem_limit_bytes=vmem_bytes,
        ),
    )(x_proj_p, h0_p, w_zr_h, w_c_h)

    return H_p[:, :B, :L]


def gru_forward_ref(X, h0, params):
    """Pure-JAX reference identical to the PyTorch module's forward()."""
    emb = params["embedding"]
    x_emb = jnp.take(emb, X, axis=0).astype(jnp.float32)

    def step(h, xe):
        cat = jnp.concatenate([h, xe], axis=1)
        z = jax.nn.sigmoid(cat @ params["w_z"].T)
        r = jax.nn.sigmoid(cat @ params["w_r"].T)
        cand = jnp.tanh(jnp.concatenate([r * h, xe], axis=1) @ params["w"].T)
        h_new = (1.0 - z) * h + z * cand
        return h_new, h_new

    _, H = jax.lax.scan(step, h0, x_emb)
    return H


def init_params(key, vocab_size, dim_input, dim_output, dim_latent):
    ks = jax.random.split(key, 6)
    scale = 0.1
    return {
        "embedding": scale * jax.random.normal(ks[0], (vocab_size, dim_input), jnp.float32),
        "w_z": scale * jax.random.normal(ks[1], (dim_latent, dim_latent + dim_input), jnp.float32),
        "w_r": scale * jax.random.normal(ks[2], (dim_latent, dim_latent + dim_input), jnp.float32),
        "w":   scale * jax.random.normal(ks[3], (dim_latent, dim_latent + dim_input), jnp.float32),
        # TODO(synk): w_d (decode()) is a trivial per-step Linear not part of
        # forward(); kept for completeness, not implemented as a kernel.
        "w_d_w": scale * jax.random.normal(ks[4], (dim_output, dim_latent), jnp.float32),
        "w_d_b": jnp.zeros((dim_output,), jnp.float32),
    }


if __name__ == "__main__":
    # Small deterministic shapes consistent with the module's forward().
    vocab_size = 32
    dim_input = 16
    dim_latent = 32
    dim_output = 8
    seq_len = 8
    batch = 4

    key = jax.random.PRNGKey(0)
    k_params, k_x, k_h = jax.random.split(key, 3)

    params = init_params(k_params, vocab_size, dim_input, dim_output, dim_latent)
    X = jax.random.randint(k_x, (seq_len, batch), 0, vocab_size, dtype=jnp.int32)
    h0 = 0.1 * jax.random.normal(k_h, (batch, dim_latent), jnp.float32)

    H_ref = gru_forward_ref(X, h0, params)

    # f32-weight path: bit-tight against the reference.
    H = jax.block_until_ready(gru_forward(X, h0, params))
    assert H.shape == (seq_len, batch, dim_latent)
    assert jnp.allclose(H, H_ref, atol=1e-5, rtol=1e-5), "f32 mismatch vs reference"

    # bf16-weight path for the recurrent matmuls (f32 accumulation + f32 state):
    # looser tolerance accounts for the bf16 weight cast only.
    H_bf16 = jax.block_until_ready(
        gru_forward(X, h0, params, weight_dtype=jnp.bfloat16))
    assert jnp.allclose(H_bf16, H_ref, atol=2e-2, rtol=0.0), "bf16 mismatch vs reference"

    print("KERNEL_OK")
</pallas_src>

<mosaic_0001>
module attributes {stable_mosaic.version = 11 : i64} {
  func.func @_gru_kernel(%arg0: i32, %arg1: memref<8x8x384xf32, #tpu.memory_space<vmem>>, %arg2: memref<8x128xf32, #tpu.memory_space<vmem>>, %arg3: memref<128x256xf32, #tpu.memory_space<vmem>>, %arg4: memref<128x128xf32, #tpu.memory_space<vmem>>, %arg5: memref<8x8x128xf32, #tpu.memory_space<vmem>>, %arg6: memref<8x128xf32, #tpu.memory_space<vmem>>) attributes {dimension_semantics = [#tpu.dimension_semantics<arbitrary>], iteration_bounds = array<i64: 1>, scalar_prefetch = 0 : i64, scratch_operands = 1 : i64, tpu.core_type = #tpu.core_type<tc>, window_params = [{transform_indices = @transform_0, window_bounds = array<i64: 8, 8, 384>}, {pipeline_mode = #tpu.pipeline_mode<synchronous>, transform_indices = @transform_1, window_bounds = array<i64: 8, 128>}, {pipeline_mode = #tpu.pipeline_mode<synchronous>, transform_indices = @transform_2, window_bounds = array<i64: 128, 256>}, {pipeline_mode = #tpu.pipeline_mode<synchronous>, transform_indices = @transform_3, window_bounds = array<i64: 128, 128>}, {transform_indices = @transform_4, window_bounds = array<i64: 8, 8, 128>}]} {
    %c0_i32 = arith.constant 0 : i32
    %0 = arith.cmpi eq, %arg0, %c0_i32 : i32
    %1 = arith.extui %0 : i1 to i32
    %c0_i32_0 = arith.constant 0 : i32
    %2 = arith.cmpi ne, %1, %c0_i32_0 : i32
    scf.if %2 {
      %c0_80 = arith.constant 0 : index
      %c0_81 = arith.constant 0 : index
      %279 = vector.load %arg2[%c0_80, %c0_81] : memref<8x128xf32, #tpu.memory_space<vmem>>, vector<8x128xf32>
      %c0_82 = arith.constant 0 : index
      %c0_83 = arith.constant 0 : index
      %280 = vector.load %arg6[%c0_82, %c0_83] : memref<8x128xf32, #tpu.memory_space<vmem>>, vector<8x128xf32>
      tpu.vector_store %arg6[%c0_82, %c0_83], %279 {strides = array<i32>} : memref<8x128xf32, #tpu.memory_space<vmem>>, vector<8x128xf32>,
    } else {
    }
    %c0 = arith.constant 0 : index
    %c0_1 = arith.constant 0 : index
    %3 = vector.load %arg3[%c0, %c0_1] : memref<128x256xf32, #tpu.memory_space<vmem>>, vector<128x256xf32>
    %c0_2 = arith.constant 0 : index
    %c0_3 = arith.constant 0 : index
    %4 = vector.load %arg4[%c0_2, %c0_3] : memref<128x128xf32, #tpu.memory_space<vmem>>, vector<128x128xf32>
    %c0_4 = arith.constant 0 : index
    %c0_5 = arith.constant 0 : index
    %5 = vector.load %arg6[%c0_4, %c0_5] : memref<8x128xf32, #tpu.memory_space<vmem>>, vector<8x128xf32>
    %c0_i32_6 = arith.constant 0 : i32
    %6 = arith.index_cast %c0_i32_6 : i32 to index
    %c0_7 = arith.constant 0 : index
    %c0_8 = arith.constant 0 : index
    %7 = vector.load %arg1[%6, %c0_7, %c0_8] : memref<8x8x384xf32, #tpu.memory_space<vmem>>, vector<1x8x384xf32>
    %8 = vector.shape_cast %7 : vector<1x8x384xf32> to vector<8x384xf32>
    %cst = arith.constant dense<0.000000e+00> : vector<8x256xf32>
    %9 = tpu.matmul %5, %3, %cst {dimension_numbers = #tpu.dot_dimension_numbers<[1], [0], [0], [1], [0, 0, 1, 1], [], []>} : vector<8x128xf32>, vector<128x256xf32>, vector<8x256xf32> -> vector<8x256xf32>
    %10 = vector.extract_strided_slice %9 {offsets = [0, 0], sizes = [8, 128], strides = [1, 1]} : vector<8x256xf32> to vector<8x128xf32>
    %11 = vector.extract_strided_slice %8 {offsets = [0, 0], sizes = [8, 128], strides = [1, 1]} : vector<8x384xf32> to vector<8x128xf32>
    %12 = arith.addf %10, %11 : vector<8x128xf32>
    %13 = arith.negf %12 : vector<8x128xf32>
    %14 = math.exp %13 : vector<8x128xf32>
    %cst_9 = arith.constant 1.000000e+00 : f32
    %15 = vector.broadcast %cst_9 : f32 to vector<8x128xf32>
    %16 = arith.addf %15, %14 : vector<8x128xf32>
    %17 = arith.divf %15, %16 : vector<8x128xf32>
    %18 = vector.extract_strided_slice %9 {offsets = [0, 128], sizes = [8, 128], strides = [1, 1]} : vector<8x256xf32> to vector<8x128xf32>
    %19 = vector.extract_strided_slice %8 {offsets = [0, 128], sizes = [8, 128], strides = [1, 1]} : vector<8x384xf32> to vector<8x128xf32>
    %20 = arith.addf %18, %19 : vector<8x128xf32>
    %21 = arith.negf %20 : vector<8x128xf32>
    %22 = math.exp %21 : vector<8x128xf32>
    %cst_10 = arith.constant 1.000000e+00 : f32
    %23 = vector.broadcast %cst_10 : f32 to vector<8x128xf32>
    %24 = arith.addf %23, %22 : vector<8x128xf32>
    %25 = arith.divf %23, %24 : vector<8x128xf32>
    %26 = arith.mulf %25, %5 : vector<8x128xf32>
    %cst_11 = arith.constant dense<0.000000e+00> : vector<8x128xf32>
    %27 = tpu.matmul %26, %4, %cst_11 {dimension_numbers = #tpu.dot_dimension_numbers<[1], [0], [0], [1], [0, 0, 1, 1], [], []>} : vector<8x128xf32>, vector<128x128xf32>, vector<8x128xf32> -> vector<8x128xf32>
    %28 = vector.extract_strided_slice %8 {offsets = [0, 256], sizes = [8, 128], strides = [1, 1]} : vector<8x384xf32> to vector<8x128xf32>
    %29 = arith.addf %27, %28 : vector<8x128xf32>
    %30 = math.tanh %29 : vector<8x128xf32>
    %cst_12 = arith.constant 1.000000e+00 : f32
    %31 = vector.broadcast %cst_12 : f32 to vector<8x128xf32>
    %32 = arith.subf %31, %17 : vector<8x128xf32>
    %33 = arith.mulf %32, %5 : vector<8x128xf32>
    %34 = arith.mulf %17, %30 : vector<8x128xf32>
    %35 = arith.addf %33, %34 : vector<8x128xf32>
    %36 = arith.index_cast %c0_i32_6 : i32 to index
    %c0_13 = arith.constant 0 : index
    %c0_14 = arith.constant 0 : index
    %37 = vector.load %arg5[%36, %c0_13, %c0_14] : memref<8x8x128xf32, #tpu.memory_space<vmem>>, vector<1x8x128xf32>
    %38 = vector.shape_cast %37 : vector<1x8x128xf32> to vector<8x128xf32>
    %39 = vector.shape_cast %35 : vector<8x128xf32> to vector<1x8x128xf32>
    tpu.vector_store %arg5[%36, %c0_13, %c0_14], %39 {strides = array<i32>} : memref<8x8x128xf32, #tpu.memory_space<vmem>>, vector<1x8x128xf32>,
    %c1_i32 = arith.constant 1 : i32
    %40 = arith.index_cast %c1_i32 : i32 to index
    %c0_15 = arith.constant 0 : index
    %c0_16 = arith.constant 0 : index
    %41 = vector.load %arg1[%40, %c0_15, %c0_16] : memref<8x8x384xf32, #tpu.memory_space<vmem>>, vector<1x8x384xf32>
    %42 = vector.shape_cast %41 : vector<1x8x384xf32> to vector<8x384xf32>
    %cst_17 = arith.constant dense<0.000000e+00> : vector<8x256xf32>
    %43 = tpu.matmul %35, %3, %cst_17 {dimension_numbers = #tpu.dot_dimension_numbers<[1], [0], [0], [1], [0, 0, 1, 1], [], []>} : vector<8x128xf32>, vector<128x256xf32>, vector<8x256xf32> -> vector<8x256xf32>
    %44 = vector.extract_strided_slice %43 {offsets = [0, 0], sizes = [8, 128], strides = [1, 1]} : vector<8x256xf32> to vector<8x128xf32>
    %45 = vector.extract_strided_slice %42 {offsets = [0, 0], sizes = [8, 128], strides = [1, 1]} : vector<8x384xf32> to vector<8x128xf32>
    %46 = arith.addf %44, %45 : vector<8x128xf32>
    %47 = arith.negf %46 : vector<8x128xf32>
    %48 = math.exp %47 : vector<8x128xf32>
    %cst_18 = arith.constant 1.000000e+00 : f32
    %49 = vector.broadcast %cst_18 : f32 to vector<8x128xf32>
    %50 = arith.addf %49, %48 : vector<8x128xf32>
    %51 = arith.divf %49, %50 : vector<8x128xf32>
    %52 = vector.extract_strided_slice %43 {offsets = [0, 128], sizes = [8, 128], strides = [1, 1]} : vector<8x256xf32> to vector<8x128xf32>
    %53 = vector.extract_strided_slice %42 {offsets = [0, 128], sizes = [8, 128], strides = [1, 1]} : vector<8x384xf32> to vector<8x128xf32>
    %54 = arith.addf %52, %53 : vector<8x128xf32>
    %55 = arith.negf %54 : vector<8x128xf32>
    %56 = math.exp %55 : vector<8x128xf32>
    %cst_19 = arith.constant 1.000000e+00 : f32
    %57 = vector.broadcast %cst_19 : f32 to vector<8x128xf32>
    %58 = arith.addf %57, %56 : vector<8x128xf32>
    %59 = arith.divf %57, %58 : vector<8x128xf32>
    %60 = arith.mulf %59, %35 : vector<8x128xf32>
    %cst_20 = arith.constant dense<0.000000e+00> : vector<8x128xf32>
    %61 = tpu.matmul %60, %4, %cst_20 {dimension_numbers = #tpu.dot_dimension_numbers<[1], [0], [0], [1], [0, 0, 1, 1], [], []>} : vector<8x128xf32>, vector<128x128xf32>, vector<8x128xf32> -> vector<8x128xf32>
    %62 = vector.extract_strided_slice %42 {offsets = [0, 256], sizes = [8, 128], strides = [1, 1]} : vector<8x384xf32> to vector<8x128xf32>
    %63 = arith.addf %61, %62 : vector<8x128xf32>
    %64 = math.tanh %63 : vector<8x128xf32>
    %cst_21 = arith.constant 1.000000e+00 : f32
    %65 = vector.broadcast %cst_21 : f32 to vector<8x128xf32>
    %66 = arith.subf %65, %51 : vector<8x128xf32>
    %67 = arith.mulf %66, %35 : vector<8x128xf32>
    %68 = arith.mulf %51, %64 : vector<8x128xf32>
    %69 = arith.addf %67, %68 : vector<8x128xf32>
    %70 = arith.index_cast %c1_i32 : i32 to index
    %c0_22 = arith.constant 0 : index
    %c0_23 = arith.constant 0 : index
    %71 = vector.load %arg5[%70, %c0_22, %c0_23] : memref<8x8x128xf32, #tpu.memory_space<vmem>>, vector<1x8x128xf32>
    %72 = vector.shape_cast %71 : vector<1x8x128xf32> to vector<8x128xf32>
    %73 = vector.shape_cast %69 : vector<8x128xf32> to vector<1x8x128xf32>
    tpu.vector_store %arg5[%70, %c0_22, %c0_23], %73 {strides = array<i32>} : memref<8x8x128xf32, #tpu.memory_space<vmem>>, vector<1x8x128xf32>,
    %c2_i32 = arith.constant 2 : i32
    %74 = arith.index_cast %c2_i32 : i32 to index
    %c0_24 = arith.constant 0 : index
    %c0_25 = arith.constant 0 : index
    %75 = vector.load %arg1[%74, %c0_24, %c0_25] : memref<8x8x384xf32, #tpu.memory_space<vmem>>, vector<1x8x384xf32>
    %76 = vector.shape_cast %75 : vector<1x8x384xf32> to vector<8x384xf32>
    %cst_26 = arith.constant dense<0.000000e+00> : vector<8x256xf32>
    %77 = tpu.matmul %69, %3, %cst_26 {dimension_numbers = #tpu.dot_dimension_numbers<[1], [0], [0], [1], [0, 0, 1, 1], [], []>} : vector<8x128xf32>, vector<128x256xf32>, vector<8x256xf32> -> vector<8x256xf32>
    %78 = vector.extract_strided_slice %77 {offsets = [0, 0], sizes = [8, 128], strides = [1, 1]} : vector<8x256xf32> to vector<8x128xf32>
    %79 = vector.extract_strided_slice %76 {offsets = [0, 0], sizes = [8, 128], strides = [1, 1]} : vector<8x384xf32> to vector<8x128xf32>
    %80 = arith.addf %78, %79 : vector<8x128xf32>
    %81 = arith.negf %80 : vector<8x128xf32>
    %82 = math.exp %81 : vector<8x128xf32>
    %cst_27 = arith.constant 1.000000e+00 : f32
    %83 = vector.broadcast %cst_27 : f32 to vector<8x128xf32>
    %84 = arith.addf %83, %82 : vector<8x128xf32>
    %85 = arith.divf %83, %84 : vector<8x128xf32>
    %86 = vector.extract_strided_slice %77 {offsets = [0, 128], sizes = [8, 128], strides = [1, 1]} : vector<8x256xf32> to vector<8x128xf32>
    %87 = vector.extract_strided_slice %76 {offsets = [0, 128], sizes = [8, 128], strides = [1, 1]} : vector<8x384xf32> to vector<8x128xf32>
    %88 = arith.addf %86, %87 : vector<8x128xf32>
    %89 = arith.negf %88 : vector<8x128xf32>
    %90 = math.exp %89 : vector<8x128xf32>
    %cst_28 = arith.constant 1.000000e+00 : f32
    %91 = vector.broadcast %cst_28 : f32 to vector<8x128xf32>
    %92 = arith.addf %91, %90 : vector<8x128xf32>
    %93 = arith.divf %91, %92 : vector<8x128xf32>
    %94 = arith.mulf %93, %69 : vector<8x128xf32>
    %cst_29 = arith.constant dense<0.000000e+00> : vector<8x128xf32>
    %95 = tpu.matmul %94, %4, %cst_29 {dimension_numbers = #tpu.dot_dimension_numbers<[1], [0], [0], [1], [0, 0, 1, 1], [], []>} : vector<8x128xf32>, vector<128x128xf32>, vector<8x128xf32> -> vector<8x128xf32>
    %96 = vector.extract_strided_slice %76 {offsets = [0, 256], sizes = [8, 128], strides = [1, 1]} : vector<8x384xf32> to vector<8x128xf32>
    %97 = arith.addf %95, %96 : vector<8x128xf32>
    %98 = math.tanh %97 : vector<8x128xf32>
    %cst_30 = arith.constant 1.000000e+00 : f32
    %99 = vector.broadcast %cst_30 : f32 to vector<8x128xf32>
    %100 = arith.subf %99, %85 : vector<8x128xf32>
    %101 = arith.mulf %100, %69 : vector<8x128xf32>
    %102 = arith.mulf %85, %98 : vector<8x128xf32>
    %103 = arith.addf %101, %102 : vector<8x128xf32>
    %104 = arith.index_cast %c2_i32 : i32 to index
    %c0_31 = arith.constant 0 : index
    %c0_32 = arith.constant 0 : index
    %105 = vector.load %arg5[%104, %c0_31, %c0_32] : memref<8x8x128xf32, #tpu.memory_space<vmem>>, vector<1x8x128xf32>
    %106 = vector.shape_cast %105 : vector<1x8x128xf32> to vector<8x128xf32>
    %107 = vector.shape_cast %103 : vector<8x128xf32> to vector<1x8x128xf32>
    tpu.vector_store %arg5[%104, %c0_31, %c0_32], %107 {strides = array<i32>} : memref<8x8x128xf32, #tpu.memory_space<vmem>>, vector<1x8x128xf32>,
    %c3_i32 = arith.constant 3 : i32
    %108 = arith.index_cast %c3_i32 : i32 to index
    %c0_33 = arith.constant 0 : index
    %c0_34 = arith.constant 0 : index
    %109 = vector.load %arg1[%108, %c0_33, %c0_34] : memref<8x8x384xf32, #tpu.memory_space<vmem>>, vector<1x8x384xf32>
    %110 = vector.shape_cast %109 : vector<1x8x384xf32> to vector<8x384xf32>
    %cst_35 = arith.constant dense<0.000000e+00> : vector<8x256xf32>
    %111 = tpu.matmul %103, %3, %cst_35 {dimension_numbers = #tpu.dot_dimension_numbers<[1], [0], [0], [1], [0, 0, 1, 1], [], []>} : vector<8x128xf32>, vector<128x256xf32>, vector<8x256xf32> -> vector<8x256xf32>
    %112 = vector.extract_strided_slice %111 {offsets = [0, 0], sizes = [8, 128], strides = [1, 1]} : vector<8x256xf32> to vector<8x128xf32>
    %113 = vector.extract_strided_slice %110 {offsets = [0, 0], sizes = [8, 128], strides = [1, 1]} : vector<8x384xf32> to vector<8x128xf32>
    %114 = arith.addf %112, %113 : vector<8x128xf32>
    %115 = arith.negf %114 : vector<8x128xf32>
    %116 = math.exp %115 : vector<8x128xf32>
    %cst_36 = arith.constant 1.000000e+00 : f32
    %117 = vector.broadcast %cst_36 : f32 to vector<8x128xf32>
    %118 = arith.addf %117, %116 : vector<8x128xf32>
    %119 = arith.divf %117, %118 : vector<8x128xf32>
    %120 = vector.extract_strided_slice %111 {offsets = [0, 128], sizes = [8, 128], strides = [1, 1]} : vector<8x256xf32> to vector<8x128xf32>
    %121 = vector.extract_strided_slice %110 {offsets = [0, 128], sizes = [8, 128], strides = [1, 1]} : vector<8x384xf32> to vector<8x128xf32>
    %122 = arith.addf %120, %121 : vector<8x128xf32>
    %123 = arith.negf %122 : vector<8x128xf32>
    %124 = math.exp %123 : vector<8x128xf32>
    %cst_37 = arith.constant 1.000000e+00 : f32
    %125 = vector.broadcast %cst_37 : f32 to vector<8x128xf32>
    %126 = arith.addf %125, %124 : vector<8x128xf32>
    %127 = arith.divf %125, %126 : vector<8x128xf32>
    %128 = arith.mulf %127, %103 : vector<8x128xf32>
    %cst_38 = arith.constant dense<0.000000e+00> : vector<8x128xf32>
    %129 = tpu.matmul %128, %4, %cst_38 {dimension_numbers = #tpu.dot_dimension_numbers<[1], [0], [0], [1], [0, 0, 1, 1], [], []>} : vector<8x128xf32>, vector<128x128xf32>, vector<8x128xf32> -> vector<8x128xf32>
    %130 = vector.extract_strided_slice %110 {offsets = [0, 256], sizes = [8, 128], strides = [1, 1]} : vector<8x384xf32> to vector<8x128xf32>
    %131 = arith.addf %129, %130 : vector<8x128xf32>
    %132 = math.tanh %131 : vector<8x128xf32>
    %cst_39 = arith.constant 1.000000e+00 : f32
    %133 = vector.broadcast %cst_39 : f32 to vector<8x128xf32>
    %134 = arith.subf %133, %119 : vector<8x128xf32>
    %135 = arith.mulf %134, %103 : vector<8x128xf32>
    %136 = arith.mulf %119, %132 : vector<8x128xf32>
    %137 = arith.addf %135, %136 : vector<8x128xf32>
    %138 = arith.index_cast %c3_i32 : i32 to index
    %c0_40 = arith.constant 0 : index
    %c0_41 = arith.constant 0 : index
    %139 = vector.load %arg5[%138, %c0_40, %c0_41] : memref<8x8x128xf32, #tpu.memory_space<vmem>>, vector<1x8x128xf32>
    %140 = vector.shape_cast %139 : vector<1x8x128xf32> to vector<8x128xf32>
    %141 = vector.shape_cast %137 : vector<8x128xf32> to vector<1x8x128xf32>
    tpu.vector_store %arg5[%138, %c0_40, %c0_41], %141 {strides = array<i32>} : memref<8x8x128xf32, #tpu.memory_space<vmem>>, vector<1x8x128xf32>,
    %c4_i32 = arith.constant 4 : i32
    %142 = arith.index_cast %c4_i32 : i32 to index
    %c0_42 = arith.constant 0 : index
    %c0_43 = arith.constant 0 : index
    %143 = vector.load %arg1[%142, %c0_42, %c0_43] : memref<8x8x384xf32, #tpu.memory_space<vmem>>, vector<1x8x384xf32>
    %144 = vector.shape_cast %143 : vector<1x8x384xf32> to vector<8x384xf32>
    %cst_44 = arith.constant dense<0.000000e+00> : vector<8x256xf32>
    %145 = tpu.matmul %137, %3, %cst_44 {dimension_numbers = #tpu.dot_dimension_numbers<[1], [0], [0], [1], [0, 0, 1, 1], [], []>} : vector<8x128xf32>, vector<128x256xf32>, vector<8x256xf32> -> vector<8x256xf32>
    %146 = vector.extract_strided_slice %145 {offsets = [0, 0], sizes = [8, 128], strides = [1, 1]} : vector<8x256xf32> to vector<8x128xf32>
    %147 = vector.extract_strided_slice %144 {offsets = [0, 0], sizes = [8, 128], strides = [1, 1]} : vector<8x384xf32> to vector<8x128xf32>
    %148 = arith.addf %146, %147 : vector<8x128xf32>
    %149 = arith.negf %148 : vector<8x128xf32>
    %150 = math.exp %149 : vector<8x128xf32>
    %cst_45 = arith.constant 1.000000e+00 : f32
    %151 = vector.broadcast %cst_45 : f32 to vector<8x128xf32>
    %152 = arith.addf %151, %150 : vector<8x128xf32>
    %153 = arith.divf %151, %152 : vector<8x128xf32>
    %154 = vector.extract_strided_slice %145 {offsets = [0, 128], sizes = [8, 128], strides = [1, 1]} : vector<8x256xf32> to vector<8x128xf32>
    %155 = vector.extract_strided_slice %144 {offsets = [0, 128], sizes = [8, 128], strides = [1, 1]} : vector<8x384xf32> to vector<8x128xf32>
    %156 = arith.addf %154, %155 : vector<8x128xf32>
    %157 = arith.negf %156 : vector<8x128xf32>
    %158 = math.exp %157 : vector<8x128xf32>
    %cst_46 = arith.constant 1.000000e+00 : f32
    %159 = vector.broadcast %cst_46 : f32 to vector<8x128xf32>
    %160 = arith.addf %159, %158 : vector<8x128xf32>
    %161 = arith.divf %159, %160 : vector<8x128xf32>
    %162 = arith.mulf %161, %137 : vector<8x128xf32>
    %cst_47 = arith.constant dense<0.000000e+00> : vector<8x128xf32>
    %163 = tpu.matmul %162, %4, %cst_47 {dimension_numbers = #tpu.dot_dimension_numbers<[1], [0], [0], [1], [0, 0, 1, 1], [], []>} : vector<8x128xf32>, vector<128x128xf32>, vector<8x128xf32> -> vector<8x128xf32>
    %164 = vector.extract_strided_slice %144 {offsets = [0, 256], sizes = [8, 128], strides = [1, 1]} : vector<8x384xf32> to vector<8x128xf32>
    %165 = arith.addf %163, %164 : vector<8x128xf32>
    %166 = math.tanh %165 : vector<8x128xf32>
    %cst_48 = arith.constant 1.000000e+00 : f32
    %167 = vector.broadcast %cst_48 : f32 to vector<8x128xf32>
    %168 = arith.subf %167, %153 : vector<8x128xf32>
    %169 = arith.mulf %168, %137 : vector<8x128xf32>
    %170 = arith.mulf %153, %166 : vector<8x128xf32>
    %171 = arith.addf %169, %170 : vector<8x128xf32>
    %172 = arith.index_cast %c4_i32 : i32 to index
    %c0_49 = arith.constant 0 : index
    %c0_50 = arith.constant 0 : index
    %173 = vector.load %arg5[%172, %c0_49, %c0_50] : memref<8x8x128xf32, #tpu.memory_space<vmem>>, vector<1x8x128xf32>
    %174 = vector.shape_cast %173 : vector<1x8x128xf32> to vector<8x128xf32>
    %175 = vector.shape_cast %171 : vector<8x128xf32> to vector<1x8x128xf32>
    tpu.vector_store %arg5[%172, %c0_49, %c0_50], %175 {strides = array<i32>} : memref<8x8x128xf32, #tpu.memory_space<vmem>>, vector<1x8x128xf32>,
    %c5_i32 = arith.constant 5 : i32
    %176 = arith.index_cast %c5_i32 : i32 to index
    %c0_51 = arith.constant 0 : index
    %c0_52 = arith.constant 0 : index
    %177 = vector.load %arg1[%176, %c0_51, %c0_52] : memref<8x8x384xf32, #tpu.memory_space<vmem>>, vector<1x8x384xf32>
    %178 = vector.shape_cast %177 : vector<1x8x384xf32> to vector<8x384xf32>
    %cst_53 = arith.constant dense<0.000000e+00> : vector<8x256xf32>
    %179 = tpu.matmul %171, %3, %cst_53 {dimension_numbers = #tpu.dot_dimension_numbers<[1], [0], [0], [1], [0, 0, 1, 1], [], []>} : vector<8x128xf32>, vector<128x256xf32>, vector<8x256xf32> -> vector<8x256xf32>
    %180 = vector.extract_strided_slice %179 {offsets = [0, 0], sizes = [8, 128], strides = [1, 1]} : vector<8x256xf32> to vector<8x128xf32>
    %181 = vector.extract_strided_slice %178 {offsets = [0, 0], sizes = [8, 128], strides = [1, 1]} : vector<8x384xf32> to vector<8x128xf32>
    %182 = arith.addf %180, %181 : vector<8x128xf32>
    %183 = arith.negf %182 : vector<8x128xf32>
    %184 = math.exp %183 : vector<8x128xf32>
    %cst_54 = arith.constant 1.000000e+00 : f32
    %185 = vector.broadcast %cst_54 : f32 to vector<8x128xf32>
    %186 = arith.addf %185, %184 : vector<8x128xf32>
    %187 = arith.divf %185, %186 : vector<8x128xf32>
    %188 = vector.extract_strided_slice %179 {offsets = [0, 128], sizes = [8, 128], strides = [1, 1]} : vector<8x256xf32> to vector<8x128xf32>
    %189 = vector.extract_strided_slice %178 {offsets = [0, 128], sizes = [8, 128], strides = [1, 1]} : vector<8x384xf32> to vector<8x128xf32>
    %190 = arith.addf %188, %189 : vector<8x128xf32>
    %191 = arith.negf %190 : vector<8x128xf32>
    %192 = math.exp %191 : vector<8x128xf32>
    %cst_55 = arith.constant 1.000000e+00 : f32
    %193 = vector.broadcast %cst_55 : f32 to vector<8x128xf32>
    %194 = arith.addf %193, %192 : vector<8x128xf32>
    %195 = arith.divf %193, %194 : vector<8x128xf32>
    %196 = arith.mulf %195, %171 : vector<8x128xf32>
    %cst_56 = arith.constant dense<0.000000e+00> : vector<8x128xf32>
    %197 = tpu.matmul %196, %4, %cst_56 {dimension_numbers = #tpu.dot_dimension_numbers<[1], [0], [0], [1], [0, 0, 1, 1], [], []>} : vector<8x128xf32>, vector<128x128xf32>, vector<8x128xf32> -> vector<8x128xf32>
    %198 = vector.extract_strided_slice %178 {offsets = [0, 256], sizes = [8, 128], strides = [1, 1]} : vector<8x384xf32> to vector<8x128xf32>
    %199 = arith.addf %197, %198 : vector<8x128xf32>
    %200 = math.tanh %199 : vector<8x128xf32>
    %cst_57 = arith.constant 1.000000e+00 : f32
    %201 = vector.broadcast %cst_57 : f32 to vector<8x128xf32>
    %202 = arith.subf %201, %187 : vector<8x128xf32>
    %203 = arith.mulf %202, %171 : vector<8x128xf32>
    %204 = arith.mulf %187, %200 : vector<8x128xf32>
    %205 = arith.addf %203, %204 : vector<8x128xf32>
    %206 = arith.index_cast %c5_i32 : i32 to index
    %c0_58 = arith.constant 0 : index
    %c0_59 = arith.constant 0 : index
    %207 = vector.load %arg5[%206, %c0_58, %c0_59] : memref<8x8x128xf32, #tpu.memory_space<vmem>>, vector<1x8x128xf32>
    %208 = vector.shape_cast %207 : vector<1x8x128xf32> to vector<8x128xf32>
    %209 = vector.shape_cast %205 : vector<8x128xf32> to vector<1x8x128xf32>
    tpu.vector_store %arg5[%206, %c0_58, %c0_59], %209 {strides = array<i32>} : memref<8x8x128xf32, #tpu.memory_space<vmem>>, vector<1x8x128xf32>,
    %c6_i32 = arith.constant 6 : i32
    %210 = arith.index_cast %c6_i32 : i32 to index
    %c0_60 = arith.constant 0 : index
    %c0_61 = arith.constant 0 : index
    %211 = vector.load %arg1[%210, %c0_60, %c0_61] : memref<8x8x384xf32, #tpu.memory_space<vmem>>, vector<1x8x384xf32>
    %212 = vector.shape_cast %211 : vector<1x8x384xf32> to vector<8x384xf32>
    %cst_62 = arith.constant dense<0.000000e+00> : vector<8x256xf32>
    %213 = tpu.matmul %205, %3, %cst_62 {dimension_numbers = #tpu.dot_dimension_numbers<[1], [0], [0], [1], [0, 0, 1, 1], [], []>} : vector<8x128xf32>, vector<128x256xf32>, vector<8x256xf32> -> vector<8x256xf32>
    %214 = vector.extract_strided_slice %213 {offsets = [0, 0], sizes = [8, 128], strides = [1, 1]} : vector<8x256xf32> to vector<8x128xf32>
    %215 = vector.extract_strided_slice %212 {offsets = [0, 0], sizes = [8, 128], strides = [1, 1]} : vector<8x384xf32> to vector<8x128xf32>
    %216 = arith.addf %214, %215 : vector<8x128xf32>
    %217 = arith.negf %216 : vector<8x128xf32>
    %218 = math.exp %217 : vector<8x128xf32>
    %cst_63 = arith.constant 1.000000e+00 : f32
    %219 = vector.broadcast %cst_63 : f32 to vector<8x128xf32>
    %220 = arith.addf %219, %218 : vector<8x128xf32>
    %221 = arith.divf %219, %220 : vector<8x128xf32>
    %222 = vector.extract_strided_slice %213 {offsets = [0, 128], sizes = [8, 128], strides = [1, 1]} : vector<8x256xf32> to vector<8x128xf32>
    %223 = vector.extract_strided_slice %212 {offsets = [0, 128], sizes = [8, 128], strides = [1, 1]} : vector<8x384xf32> to vector<8x128xf32>
    %224 = arith.addf %222, %223 : vector<8x128xf32>
    %225 = arith.negf %224 : vector<8x128xf32>
    %226 = math.exp %225 : vector<8x128xf32>
    %cst_64 = arith.constant 1.000000e+00 : f32
    %227 = vector.broadcast %cst_64 : f32 to vector<8x128xf32>
    %228 = arith.addf %227, %226 : vector<8x128xf32>
    %229 = arith.divf %227, %228 : vector<8x128xf32>
    %230 = arith.mulf %229, %205 : vector<8x128xf32>
    %cst_65 = arith.constant dense<0.000000e+00> : vector<8x128xf32>
    %231 = tpu.matmul %230, %4, %cst_65 {dimension_numbers = #tpu.dot_dimension_numbers<[1], [0], [0], [1], [0, 0, 1, 1], [], []>} : vector<8x128xf32>, vector<128x128xf32>, vector<8x128xf32> -> vector<8x128xf32>
    %232 = vector.extract_strided_slice %212 {offsets = [0, 256], sizes = [8, 128], strides = [1, 1]} : vector<8x384xf32> to vector<8x128xf32>
    %233 = arith.addf %231, %232 : vector<8x128xf32>
    %234 = math.tanh %233 : vector<8x128xf32>
    %cst_66 = arith.constant 1.000000e+00 : f32
    %235 = vector.broadcast %cst_66 : f32 to vector<8x128xf32>
    %236 = arith.subf %235, %221 : vector<8x128xf32>
    %237 = arith.mulf %236, %205 : vector<8x128xf32>
    %238 = arith.mulf %221, %234 : vector<8x128xf32>
    %239 = arith.addf %237, %238 : vector<8x128xf32>
    %240 = arith.index_cast %c6_i32 : i32 to index
    %c0_67 = arith.constant 0 : index
    %c0_68 = arith.constant 0 : index
    %241 = vector.load %arg5[%240, %c0_67, %c0_68] : memref<8x8x128xf32, #tpu.memory_space<vmem>>, vector<1x8x128xf32>
    %242 = vector.shape_cast %241 : vector<1x8x128xf32> to vector<8x128xf32>
    %243 = vector.shape_cast %239 : vector<8x128xf32> to vector<1x8x128xf32>
    tpu.vector_store %arg5[%240, %c0_67, %c0_68], %243 {strides = array<i32>} : memref<8x8x128xf32, #tpu.memory_space<vmem>>, vector<1x8x128xf32>,
    %c7_i32 = arith.constant 7 : i32
    %244 = arith.index_cast %c7_i32 : i32 to index
    %c0_69 = arith.constant 0 : index
    %c0_70 = arith.constant 0 : index
    %245 = vector.load %arg1[%244, %c0_69, %c0_70] : memref<8x8x384xf32, #tpu.memory_space<vmem>>, vector<1x8x384xf32>
    %246 = vector.shape_cast %245 : vector<1x8x384xf32> to vector<8x384xf32>
    %cst_71 = arith.constant dense<0.000000e+00> : vector<8x256xf32>
    %247 = tpu.matmul %239, %3, %cst_71 {dimension_numbers = #tpu.dot_dimension_numbers<[1], [0], [0], [1], [0, 0, 1, 1], [], []>} : vector<8x128xf32>, vector<128x256xf32>, vector<8x256xf32> -> vector<8x256xf32>
    %248 = vector.extract_strided_slice %247 {offsets = [0, 0], sizes = [8, 128], strides = [1, 1]} : vector<8x256xf32> to vector<8x128xf32>
    %249 = vector.extract_strided_slice %246 {offsets = [0, 0], sizes = [8, 128], strides = [1, 1]} : vector<8x384xf32> to vector<8x128xf32>
    %250 = arith.addf %248, %249 : vector<8x128xf32>
    %251 = arith.negf %250 : vector<8x128xf32>
    %252 = math.exp %251 : vector<8x128xf32>
    %cst_72 = arith.constant 1.000000e+00 : f32
    %253 = vector.broadcast %cst_72 : f32 to vector<8x128xf32>
    %254 = arith.addf %253, %252 : vector<8x128xf32>
    %255 = arith.divf %253, %254 : vector<8x128xf32>
    %256 = vector.extract_strided_slice %247 {offsets = [0, 128], sizes = [8, 128], strides = [1, 1]} : vector<8x256xf32> to vector<8x128xf32>
    %257 = vector.extract_strided_slice %246 {offsets = [0, 128], sizes = [8, 128], strides = [1, 1]} : vector<8x384xf32> to vector<8x128xf32>
    %258 = arith.addf %256, %257 : vector<8x128xf32>
    %259 = arith.negf %258 : vector<8x128xf32>
    %260 = math.exp %259 : vector<8x128xf32>
    %cst_73 = arith.constant 1.000000e+00 : f32
    %261 = vector.broadcast %cst_73 : f32 to vector<8x128xf32>
    %262 = arith.addf %261, %260 : vector<8x128xf32>
    %263 = arith.divf %261, %262 : vector<8x128xf32>
    %264 = arith.mulf %263, %239 : vector<8x128xf32>
    %cst_74 = arith.constant dense<0.000000e+00> : vector<8x128xf32>
    %265 = tpu.matmul %264, %4, %cst_74 {dimension_numbers = #tpu.dot_dimension_numbers<[1], [0], [0], [1], [0, 0, 1, 1], [], []>} : vector<8x128xf32>, vector<128x128xf32>, vector<8x128xf32> -> vector<8x128xf32>
    %266 = vector.extract_strided_slice %246 {offsets = [0, 256], sizes = [8, 128], strides = [1, 1]} : vector<8x384xf32> to vector<8x128xf32>
    %267 = arith.addf %265, %266 : vector<8x128xf32>
    %268 = math.tanh %267 : vector<8x128xf32>
    %cst_75 = arith.constant 1.000000e+00 : f32
    %269 = vector.broadcast %cst_75 : f32 to vector<8x128xf32>
    %270 = arith.subf %269, %255 : vector<8x128xf32>
    %271 = arith.mulf %270, %239 : vector<8x128xf32>
    %272 = arith.mulf %255, %268 : vector<8x128xf32>
    %273 = arith.addf %271, %272 : vector<8x128xf32>
    %274 = arith.index_cast %c7_i32 : i32 to index
    %c0_76 = arith.constant 0 : index
    %c0_77 = arith.constant 0 : index
    %275 = vector.load %arg5[%274, %c0_76, %c0_77] : memref<8x8x128xf32, #tpu.memory_space<vmem>>, vector<1x8x128xf32>
    %276 = vector.shape_cast %275 : vector<1x8x128xf32> to vector<8x128xf32>
    %277 = vector.shape_cast %273 : vector<8x128xf32> to vector<1x8x128xf32>
    tpu.vector_store %arg5[%274, %c0_76, %c0_77], %277 {strides = array<i32>} : memref<8x8x128xf32, #tpu.memory_space<vmem>>, vector<1x8x128xf32>,
    %c8_i32 = arith.constant 8 : i32
    %c0_78 = arith.constant 0 : index
    %c0_79 = arith.constant 0 : index
    %278 = vector.load %arg6[%c0_78, %c0_79] : memref<8x128xf32, #tpu.memory_space<vmem>>, vector<8x128xf32>
    tpu.vector_store %arg6[%c0_78, %c0_79], %273 {strides = array<i32>} : memref<8x128xf32, #tpu.memory_space<vmem>>, vector<8x128xf32>,
    return
  }
  func.func @transform_0(%arg0: i32) -> (i32, i32, i32) {
    %c0_i32 = arith.constant 0 : i32
    %c0_i32_0 = arith.constant 0 : i32
    %c0_i32_1 = arith.constant 0 : i32
    return %arg0, %c0_i32, %c0_i32_0 : i32, i32, i32
  }
  func.func @transform_1(%arg0: i32) -> (i32, i32) {
    %c0_i32 = arith.constant 0 : i32
    %c0_i32_0 = arith.constant 0 : i32
    %c0_i32_1 = arith.constant 0 : i32
    return %c0_i32, %c0_i32_0 : i32, i32
  }
  func.func @transform_2(%arg0: i32) -> (i32, i32) {
    %c0_i32 = arith.constant 0 : i32
    %c0_i32_0 = arith.constant 0 : i32
    %c0_i32_1 = arith.constant 0 : i32
    return %c0_i32, %c0_i32_0 : i32, i32
  }
  func.func @transform_3(%arg0: i32) -> (i32, i32) {
    %c0_i32 = arith.constant 0 : i32
    %c0_i32_0 = arith.constant 0 : i32
    %c0_i32_1 = arith.constant 0 : i32
    return %c0_i32, %c0_i32_0 : i32, i32
  }
  func.func @transform_4(%arg0: i32) -> (i32, i32, i32) {
    %c0_i32 = arith.constant 0 : i32
    %c0_i32_0 = arith.constant 0 : i32
    %c0_i32_1 = arith.constant 0 : i32
    return %arg0, %c0_i32, %c0_i32_0 : i32, i32, i32
  }
}

</mosaic_0001>

<llo_original>
// kernel: tpu_custom_call.1
$region0: #{tpu_custom_call.1}
  #allocation0 [shape = 'u32[]', space=smem, size = 0x4, offset = 0x4, fixed_abs, tag = 'smem constant byte address 0x4 - core index']
  #allocation1 [shape = 'u32[144,128]{1,0:T(1,128)}', space=vmem, size = 0x12000, scoped, tag = 'internal scratch']
  #allocation2 [shape = 'f32[8,128]{1,0:T(8,128)}', space=vmem, size = 0x1000, scoped, tag = 'scratch operand']
  %s0 = inlined_call_operand.hbm [shape: f32[8,8,384], index: 0, kind: input, shape index: {}]
  %s1 = inlined_call_operand.hbm [shape: f32[8,128], index: 1, kind: input, shape index: {}]
  %s2 = inlined_call_operand.hbm [shape: f32[128,256], index: 2, kind: input, shape index: {}]
  %s3 = inlined_call_operand.hbm [shape: f32[128,128], index: 3, kind: input, shape index: {}]
  %s4 = inlined_call_operand.hbm [shape: f32[8,8,128], index: 4, kind: output, shape index: {}]
  %s5 = sld [smem:[#allocation0]]
  $region46: #{tpu_custom_call.1} parent=0
    _
  %s7 = ssub.s32 1, %s5
  %s8 = scalar_select 0, %s7, %s5
  $region1: #{tpu_custom_call.1} parent=0
    #allocation3 [shape = 'u8[98304]{0}', space=vmem, size = 0x18000, scoped, tag = 'input window, operand 0, single buffered']
    #allocation4 [shape = 's32[1]{0}', space=sflag, size = 0x4, scoped, tag = 'scoped memory for tpu_custom_call.1']
    #allocation5 [shape = 's32[1]{0}', space=sflag, size = 0x4, scoped, tag = 'scoped memory for tpu_custom_call.1']
    #allocation6 [shape = 'u8[4096]{0}', space=vmem, size = 0x1000, scoped, tag = 'input window, operand 1, single buffered']
    #allocation7 [shape = 's32[1]{0}', space=sflag, size = 0x4, scoped, tag = 'scoped memory for tpu_custom_call.1']
    #allocation8 [shape = 'u8[131072]{0}', space=vmem, size = 0x20000, scoped, tag = 'input window, operand 2, single buffered']
    #allocation9 [shape = 'u8[65536]{0}', space=vmem, size = 0x10000, scoped, tag = 'input window, operand 3, single buffered']
    #allocation10 [shape = 's32[1]{0}', space=sflag, size = 0x4, scoped, tag = 'scoped memory for tpu_custom_call.1']
    #allocation11 [shape = 'u8[32768]{0}', space=vmem, size = 0x8000, scoped, tag = 'output window, operand 0, single buffered']
    %9 = vsyncpa [#allocation4], 0
    %10 = vsyncpa [#allocation7], 0
    %11 = vsyncpa [#allocation10], 0
    %12 = vsyncpa [#allocation5], 0
    // Predicated region
    $region2: #{tpu_custom_call.1} parent=1 // pred_check
      _
    $region3: #{tpu_custom_call.1} parent=1 // pred_check_branch
      %14 = sbr.rel (0) target = $region5
    $region4: #{tpu_custom_call.1} parent=1 // pred_region
      %s16 = ssub.s32 3072, 3072
      %17 = vsyncadd [#allocation4], %s16
      %s18 = sshll.u32 [#allocation3], 4
      %s19 = int_to_ptr.vmem [resolvable:$true] %s18
      %24 = dma.hbm_to_vmem [thread:$0]  %s0, 3072, %s19, [#allocation4], 384, 384, 24
    $region5: #{tpu_custom_call.1} parent=1 // pred_fallthru
      _
    // Predicated region
    $region6: #{tpu_custom_call.1} parent=1 // pred_check
      _
    $region7: #{tpu_custom_call.1} parent=1 // pred_check_branch
      %26 = sbr.rel (0) target = $region9
    $region8: #{tpu_custom_call.1} parent=1 // pred_region
      %s28 = ssub.s32 128, 128
      %29 = vsyncadd [#allocation7], %s28
      %s31 = sshll.u32 [#allocation6], 4
      %s32 = int_to_ptr.vmem [resolvable:$true] %s31
      %34 = dma.hbm_to_vmem [thread:$0]  %s1, 128, %s32, [#allocation7]
    $region9: #{tpu_custom_call.1} parent=1 // pred_fallthru
      _
    // Predicated region
    $region10: #{tpu_custom_call.1} parent=1 // pred_check
      _
    $region11: #{tpu_custom_call.1} parent=1 // pred_check_branch
      %36 = sbr.rel (0) target = $region13
    $region12: #{tpu_custom_call.1} parent=1 // pred_region
      %s38 = ssub.s32 4096, 4096
      %39 = vsyncadd [#allocation7], %s38
      %s40 = sshll.u32 [#allocation8], 4
      %s41 = int_to_ptr.vmem [resolvable:$true] %s40
      %46 = dma.hbm_to_vmem [thread:$0]  %s2, 4096, %s41, [#allocation7], 256, 256, 16
    $region13: #{tpu_custom_call.1} parent=1 // pred_fallthru
      _
    // Predicated region
    $region14: #{tpu_custom_call.1} parent=1 // pred_check
      _
    $region15: #{tpu_custom_call.1} parent=1 // pred_check_branch
      %48 = sbr.rel (0) target = $region17
    $region16: #{tpu_custom_call.1} parent=1 // pred_region
      %s50 = ssub.s32 2048, 2048
      %51 = vsyncadd [#allocation10], %s50
      %s52 = sshll.u32 [#allocation9], 4
      %s53 = int_to_ptr.vmem [resolvable:$true] %s52
      %58 = dma.hbm_to_vmem [thread:$0]  %s3, 2048, %s53, [#allocation10], 128, 128, 8
    $region17: #{tpu_custom_call.1} parent=1 // pred_fallthru
      _
    // Predicated region
    $region18: #{tpu_custom_call.1} parent=1 // pred_check
      _
    $region19: #{tpu_custom_call.1} parent=1 // pred_check_branch
      %60 = sbr.rel (0) target = $region21
    $region20: #{tpu_custom_call.1} parent=1 // pred_region
      %61 = dma.done [#allocation4], 3072
    $region21: #{tpu_custom_call.1} parent=1 // pred_fallthru
      _
    // Predicated region
    $region22: #{tpu_custom_call.1} parent=1 // pred_check
      _
    $region23: #{tpu_custom_call.1} parent=1 // pred_check_branch
      %63 = sbr.rel (0) target = $region25
    $region24: #{tpu_custom_call.1} parent=1 // pred_region
      %64 = dma.done [#allocation7], 128
    $region25: #{tpu_custom_call.1} parent=1 // pred_fallthru
      _
    // Predicated region
    $region26: #{tpu_custom_call.1} parent=1 // pred_check
      _
    $region27: #{tpu_custom_call.1} parent=1 // pred_check_branch
      %66 = sbr.rel (0) target = $region29
    $region28: #{tpu_custom_call.1} parent=1 // pred_region
      %67 = dma.done [#allocation7], 4096
    $region29: #{tpu_custom_call.1} parent=1 // pred_fallthru
      _
    // Predicated region
    $region30: #{tpu_custom_call.1} parent=1 // pred_check
      _
    $region31: #{tpu_custom_call.1} parent=1 // pred_check_branch
      %69 = sbr.rel (0) target = $region33
    $region32: #{tpu_custom_call.1} parent=1 // pred_region
      %70 = dma.done [#allocation10], 2048
    $region33: #{tpu_custom_call.1} parent=1 // pred_fallthru
      _
    %p71 = scmp.eq.s32.totalorder 0, 0
    // Predicated region
    $region34: #{tpu_custom_call.1} parent=1 // pred_check
      %p72 = pneg %p71
    $region35: #{tpu_custom_call.1} parent=1 // pred_check_branch
      %74 = sbr.rel (%p72) target = $region37
    $region36: #{tpu_custom_call.1} parent=1 // pred_region
      %v75 = vld [vmem:[#allocation6] sm:$0xff]
      %76 = vst [vmem:[#allocation2] sm:$0xff] %v75
    $region37: #{tpu_custom_call.1} parent=1 // pred_fallthru
      _
    %v77 = vld [vmem:[#allocation8] sm:$0xff]
    %v78 = vld [vmem:[#allocation8 + $0x8] sm:$0xff]
    %v79 = vld [vmem:[#allocation8 + $0x10] sm:$0xff]
    %v80 = vld [vmem:[#allocation8 + $0x18] sm:$0xff]
    %v81 = vld [vmem:[#allocation8 + $0x20] sm:$0xff]
    %v82 = vld [vmem:[#allocation8 + $0x28] sm:$0xff]
    %v83 = vld [vmem:[#allocation8 + $0x30] sm:$0xff]
    %v84 = vld [vmem:[#allocation8 + $0x38] sm:$0xff]
    %v85 = vld [vmem:[#allocation8 + $0x40] sm:$0xff]
    %v86 = vld [vmem:[#allocation8 + $0x48] sm:$0xff]
    %v87 = vld [vmem:[#allocation8 + $0x50] sm:$0xff]
    %v88 = vld [vmem:[#allocation8 + $0x58] sm:$0xff]
    %v89 = vld [vmem:[#allocation8 + $0x60] sm:$0xff]
    %v90 = vld [vmem:[#allocation8 + $0x68] sm:$0xff]
    %v91 = vld [vmem:[#allocation8 + $0x70] sm:$0xff]
    %v92 = vld [vmem:[#allocation8 + $0x78] sm:$0xff]
    %v93 = vld [vmem:[#allocation8 + $0x80] sm:$0xff]
    %v94 = vld [vmem:[#allocation8 + $0x88] sm:$0xff]
    %v95 = vld [vmem:[#allocation8 + $0x90] sm:$0xff]
    %v96 = vld [vmem:[#allocation8 + $0x98] sm:$0xff]
    %v97 = vld [vmem:[#allocation8 + $0xa0] sm:$0xff]
    %v98 = vld [vmem:[#allocation8 + $0xa8] sm:$0xff]
    %v99 = vld [vmem:[#allocation8 + $0xb0] sm:$0xff]
    %v100 = vld [vmem:[#allocation8 + $0xb8] sm:$0xff]
    %v101 = vld [vmem:[#allocation8 + $0xc0] sm:$0xff]
    %v102 = vld [vmem:[#allocation8 + $0xc8] sm:$0xff]
    %v103 = vld [vmem:[#allocation8 + $0xd0] sm:$0xff]
    %v104 = vld [vmem:[#allocation8 + $0xd8] sm:$0xff]
    %v105 = vld [vmem:[#allocation8 + $0xe0] sm:$0xff]
    %v106 = vld [vmem:[#allocation8 + $0xe8] sm:$0xff]
    %v107 = vld [vmem:[#allocation8 + $0xf0] sm:$0xff]
    %v108 = vld [vmem:[#allocation8 + $0xf8] sm:$0xff]
    %v109 = vld [vmem:[#allocation9] sm:$0xff]
    %v110 = vld [vmem:[#allocation9 + $0x8] sm:$0xff]
    %v111 = vld [vmem:[#allocation9 + $0x10] sm:$0xff]
    %v112 = vld [vmem:[#allocation9 + $0x18] sm:$0xff]
    %v113 = vld [vmem:[#allocation9 + $0x20] sm:$0xff]
    %v114 = vld [vmem:[#allocation9 + $0x28] sm:$0xff]
    %v115 = vld [vmem:[#allocation9 + $0x30] sm:$0xff]
    %v116 = vld [vmem:[#allocation9 + $0x38] sm:$0xff]
    %v117 = vld [vmem:[#allocation9 + $0x40] sm:$0xff]
    %v118 = vld [vmem:[#allocation9 + $0x48] sm:$0xff]
    %v119 = vld [vmem:[#allocation9 + $0x50] sm:$0xff]
    %v120 = vld [vmem:[#allocation9 + $0x58] sm:$0xff]
    %v121 = vld [vmem:[#allocation9 + $0x60] sm:$0xff]
    %v122 = vld [vmem:[#allocation9 + $0x68] sm:$0xff]
    %v123 = vld [vmem:[#allocation9 + $0x70] sm:$0xff]
    %v124 = vld [vmem:[#allocation9 + $0x78] sm:$0xff]
    %v125 = vld [vmem:[#allocation2] sm:$0xff]
    %v126 = vld [vmem:[#allocation3] sm:$0xff]
    %v127 = vld [vmem:[#allocation3 + $0x8] sm:$0xff]
    %v128 = vld [vmem:[#allocation3 + $0x10] sm:$0xff]
    %129 = vmatprep.subr.mxu0 %v78
    %130 = vmatpush1.msra.mxu0 %v77
    %131 = vmatprep.subr.mxu0 %v80
    %132 = vmatpush1.msra.mxu0 %v79
    %133 = vmatprep.subr.mxu0 %v82
    %134 = vmatpush1.msra.mxu0 %v81
    %135 = vmatprep.subr.mxu0 %v84
    %136 = vmatpush1.msra.mxu0 %v83
    %137 = vmatprep.subr.mxu0 %v86
    %138 = vmatpush1.msra.mxu0 %v85
    %139 = vmatprep.subr.mxu0 %v88
    %140 = vmatpush1.msra.mxu0 %v87
    %141 = vmatprep.subr.mxu0 %v90
    %142 = vmatpush1.msra.mxu0 %v89
    %143 = vmatprep.subr.mxu0 %v92
    %144 = vmatpush1.msra.mxu0 %v91
    %145 = vmatprep.subr.mxu0 %v94
    %146 = vmatpush1.msra.mxu0 %v93
    %147 = vmatprep.subr.mxu0 %v96
    %148 = vmatpush1.msra.mxu0 %v95
    %149 = vmatprep.subr.mxu0 %v98
    %150 = vmatpush1.msra.mxu0 %v97
    %151 = vmatprep.subr.mxu0 %v100
    %152 = vmatpush1.msra.mxu0 %v99
    %153 = vmatprep.subr.mxu0 %v102
    %154 = vmatpush1.msra.mxu0 %v101
    %155 = vmatprep.subr.mxu0 %v104
    %156 = vmatpush1.msra.mxu0 %v103
    %157 = vmatprep.subr.mxu0 %v106
    %158 = vmatpush1.msra.mxu0 %v105
    %159 = vmatprep.subr.mxu0 %v108
    %160 = vmatpush1.msra.mxu0 %v107
    %161 = vmatprep.subr.mxu0 0.0
    %162 = vmatpush1.msra.mxu0 0.0
    %163 = vmatprep.subr.mxu0 0.0
    %164 = vmatpush1.msra.mxu0 0.0
    %165 = vmatprep.subr.mxu0 0.0
    %166 = vmatpush1.msra.mxu0 0.0
    %167 = vmatprep.subr.mxu0 0.0
    %168 = vmatpush1.msra.mxu0 0.0
    %169 = vmatprep.subr.mxu0 0.0
    %170 = vmatpush1.msra.mxu0 0.0
    %171 = vmatprep.subr.mxu0 0.0
    %172 = vmatpush1.msra.mxu0 0.0
    %173 = vmatprep.subr.mxu0 0.0
    %174 = vmatpush1.msra.mxu0 0.0
    %175 = vmatprep.subr.mxu0 0.0
    %176 = vmatpush1.msra.mxu0 0.0
    %177 = vmatprep.subr.mxu0 0.0
    %178 = vmatpush1.msra.mxu0 0.0
    %179 = vmatprep.subr.mxu0 0.0
    %180 = vmatpush1.msra.mxu0 0.0
    %181 = vmatprep.subr.mxu0 0.0
    %182 = vmatpush1.msra.mxu0 0.0
    %183 = vmatprep.subr.mxu0 0.0
    %184 = vmatpush1.msra.mxu0 0.0
    %185 = vmatprep.subr.mxu0 0.0
    %186 = vmatpush1.msra.mxu0 0.0
    %187 = vmatprep.subr.mxu0 0.0
    %188 = vmatpush1.msra.mxu0 0.0
    %189 = vmatprep.subr.mxu0 0.0
    %190 = vmatpush1.msra.mxu0 0.0
    %191 = vmatprep.subr.mxu0 0.0
    %192 = vmatpush1.msra.mxu0 0.0
    %193 = vmatprep.mubr.f32.mxu0 0.0
    %194 = vmatmul.mubr.f32.gmra.mrb[0].mxu0 %v125
    %v195 = vpop.f32.mrb[0].mxu0
    %v196 = vadd.f32 0.0, %v195
    %v197 = vpop.f32.mrb[0].mxu0
    %v198 = vadd.f32 0.0, %v197
    %199 = vdwg.mxu0
    %v200 = vadd.f32 %v196, %v126
    %v201 = vxor.u32 %v200, 2147483648
    %v202 = vmul.f32 %v201, 1.442695
    %v203 = vpow.pop %v202
    %v204 = vadd.f32 %v203, 1.0
    %v205 = vrcp.pop %v204
    %v206 = vmul.f32 1.0, %v205
    %v207 = vadd.f32 %v198, %v127
    %v208 = vxor.u32 %v207, 2147483648
    %v209 = vmul.f32 %v208, 1.442695
    %v210 = vpow.pop %v209
    %v211 = vadd.f32 %v210, 1.0
    %v212 = vrcp.pop %v211
    %v213 = vmul.f32 1.0, %v212
    %v214 = vmul.f32 %v213, %v125
    %215 = vmatprep.subr.mxu0 0.0
    %216 = vmatpush1.msra.mxu0 %v109
    %217 = vmatprep.subr.mxu0 0.0
    %218 = vmatpush1.msra.mxu0 %v110
    %219 = vmatprep.subr.mxu0 0.0
    %220 = vmatpush1.msra.mxu0 %v111
    %221 = vmatprep.subr.mxu0 0.0
    %222 = vmatpush1.msra.mxu0 %v112
    %223 = vmatprep.subr.mxu0 0.0
    %224 = vmatpush1.msra.mxu0 %v113
    %225 = vmatprep.subr.mxu0 0.0
    %226 = vmatpush1.msra.mxu0 %v114
    %227 = vmatprep.subr.mxu0 0.0
    %228 = vmatpush1.msra.mxu0 %v115
    %229 = vmatprep.subr.mxu0 0.0
    %230 = vmatpush1.msra.mxu0 %v116
    %231 = vmatprep.subr.mxu0 0.0
    %232 = vmatpush1.msra.mxu0 %v117
    %233 = vmatprep.subr.mxu0 0.0
    %234 = vmatpush1.msra.mxu0 %v118
    %235 = vmatprep.subr.mxu0 0.0
    %236 = vmatpush1.msra.mxu0 %v119
    %237 = vmatprep.subr.mxu0 0.0
    %238 = vmatpush1.msra.mxu0 %v120
    %239 = vmatprep.subr.mxu0 0.0
    %240 = vmatpush1.msra.mxu0 %v121
    %241 = vmatprep.subr.mxu0 0.0
    %242 = vmatpush1.msra.mxu0 %v122
    %243 = vmatprep.subr.mxu0 0.0
    %244 = vmatpush1.msra.mxu0 %v123
    %245 = vmatprep.subr.mxu0 0.0
    %246 = vmatpush1.msra.mxu0 %v124
    %247 = vmatprep.subr.mxu0 0.0
    %248 = vmatpush1.msra.mxu0 0.0
    %249 = vmatprep.subr.mxu0 0.0
    %250 = vmatpush1.msra.mxu0 0.0
    %251 = vmatprep.subr.mxu0 0.0
    %252 = vmatpush1.msra.mxu0 0.0
    %253 = vmatprep.subr.mxu0 0.0
    %254 = vmatpush1.msra.mxu0 0.0
    %255 = vmatprep.subr.mxu0 0.0
    %256 = vmatpush1.msra.mxu0 0.0
    %257 = vmatprep.subr.mxu0 0.0
    %258 = vmatpush1.msra.mxu0 0.0
    %259 = vmatprep.subr.mxu0 0.0
    %260 = vmatpush1.msra.mxu0 0.0
    %261 = vmatprep.subr.mxu0 0.0
    %262 = vmatpush1.msra.mxu0 0.0
    %263 = vmatprep.subr.mxu0 0.0
    %264 = vmatpush1.msra.mxu0 0.0
    %265 = vmatprep.subr.mxu0 0.0
    %266 = vmatpush1.msra.mxu0 0.0
    %267 = vmatprep.subr.mxu0 0.0
    %268 = vmatpush1.msra.mxu0 0.0
    %269 = vmatprep.subr.mxu0 0.0
    %270 = vmatpush1.msra.mxu0 0.0
    %271 = vmatprep.subr.mxu0 0.0
    %272 = vmatpush1.msra.mxu0 0.0
    %273 = vmatprep.subr.mxu0 0.0
    %274 = vmatpush1.msra.mxu0 0.0
    %275 = vmatprep.subr.mxu0 0.0
    %276 = vmatpush1.msra.mxu0 0.0
    %277 = vmatprep.subr.mxu0 0.0
    %278 = vmatpush1.msra.mxu0 0.0
    %279 = vmatprep.mubr.f32.mxu0 0.0
    %280 = vmatmul.mubr.f32.gmra.mrb[0].mxu0 %v214
    %v281 = vpop.f32.mrb[0].mxu0
    %v282 = vadd.f32 %v128, %v281
    %v283 = vpop.f32.mrb[0].mxu0
    %284 = vdwg.mxu0
    %v285 = vtanh.pop %v282
    %v286 = vsub.f32 1.0, %v206
    %v287 = vmul.f32 %v286, %v125
    %v288 = vmul.f32 %v206, %v285
    %v289 = vadd.f32 %v287, %v288
    %290 = vst [vmem:[#allocation11] sm:$0xff] %v289
    %s291 = scalar_lea.vmem [#allocation3], 24
    %v292 = vld [vmem:[%s291] sm:$0xff]
    %v293 = vld [vmem:[%s291 + $0x8] sm:$0xff]
    %v294 = vld [vmem:[%s291 + $0x10] sm:$0xff]
    %295 = vmatprep.subr.mxu0 %v78
    %296 = vmatpush1.msra.mxu0 %v77
    %297 = vmatprep.subr.mxu0 %v80
    %298 = vmatpush1.msra.mxu0 %v79
    %299 = vmatprep.subr.mxu0 %v82
    %300 = vmatpush1.msra.mxu0 %v81
    %301 = vmatprep.subr.mxu0 %v84
    %302 = vmatpush1.msra.mxu0 %v83
    %303 = vmatprep.subr.mxu0 %v86
    %304 = vmatpush1.msra.mxu0 %v85
    %305 = vmatprep.subr.mxu0 %v88
    %306 = vmatpush1.msra.mxu0 %v87
    %307 = vmatprep.subr.mxu0 %v90
    %308 = vmatpush1.msra.mxu0 %v89
    %309 = vmatprep.subr.mxu0 %v92
    %310 = vmatpush1.msra.mxu0 %v91
    %311 = vmatprep.subr.mxu0 %v94
    %312 = vmatpush1.msra.mxu0 %v93
    %313 = vmatprep.subr.mxu0 %v96
    %314 = vmatpush1.msra.mxu0 %v95
    %315 = vmatprep.subr.mxu0 %v98
    %316 = vmatpush1.msra.mxu0 %v97
    %317 = vmatprep.subr.mxu0 %v100
    %318 = vmatpush1.msra.mxu0 %v99
    %319 = vmatprep.subr.mxu0 %v102
    %320 = vmatpush1.msra.mxu0 %v101
    %321 = vmatprep.subr.mxu0 %v104
    %322 = vmatpush1.msra.mxu0 %v103
    %323 = vmatprep.subr.mxu0 %v106
    %324 = vmatpush1.msra.mxu0 %v105
    %325 = vmatprep.subr.mxu0 %v108
    %326 = vmatpush1.msra.mxu0 %v107
    %327 = vmatprep.subr.mxu0 0.0
    %328 = vmatpush1.msra.mxu0 0.0
    %329 = vmatprep.subr.mxu0 0.0
    %330 = vmatpush1.msra.mxu0 0.0
    %331 = vmatprep.subr.mxu0 0.0
    %332 = vmatpush1.msra.mxu0 0.0
    %333 = vmatprep.subr.mxu0 0.0
    %334 = vmatpush1.msra.mxu0 0.0
    %335 = vmatprep.subr.mxu0 0.0
    %336 = vmatpush1.msra.mxu0 0.0
    %337 = vmatprep.subr.mxu0 0.0
    %338 = vmatpush1.msra.mxu0 0.0
    %339 = vmatprep.subr.mxu0 0.0
    %340 = vmatpush1.msra.mxu0 0.0
    %341 = vmatprep.subr.mxu0 0.0
    %342 = vmatpush1.msra.mxu0 0.0
    %343 = vmatprep.subr.mxu0 0.0
    %344 = vmatpush1.msra.mxu0 0.0
    %345 = vmatprep.subr.mxu0 0.0
    %346 = vmatpush1.msra.mxu0 0.0
    %347 = vmatprep.subr.mxu0 0.0
    %348 = vmatpush1.msra.mxu0 0.0
    %349 = vmatprep.subr.mxu0 0.0
    %350 = vmatpush1.msra.mxu0 0.0
    %351 = vmatprep.subr.mxu0 0.0
    %352 = vmatpush1.msra.mxu0 0.0
    %353 = vmatprep.subr.mxu0 0.0
    %354 = vmatpush1.msra.mxu0 0.0
    %355 = vmatprep.subr.mxu0 0.0
    %356 = vmatpush1.msra.mxu0 0.0
    %357 = vmatprep.subr.mxu0 0.0
    %358 = vmatpush1.msra.mxu0 0.0
    %359 = vmatprep.mubr.f32.mxu0 0.0
    %360 = vmatmul.mubr.f32.gmra.mrb[0].mxu0 %v289
    %v361 = vpop.f32.mrb[0].mxu0
    %v362 = vadd.f32 0.0, %v361
    %v363 = vpop.f32.mrb[0].mxu0
    %v364 = vadd.f32 0.0, %v363
    %365 = vdwg.mxu0
    %v366 = vadd.f32 %v362, %v292
    %v367 = vxor.u32 %v366, 2147483648
    %v368 = vmul.f32 %v367, 1.442695
    %v369 = vpow.pop %v368
    %v370 = vadd.f32 %v369, 1.0
    %v371 = vrcp.pop %v370
    %v372 = vmul.f32 1.0, %v371
    %v373 = vadd.f32 %v364, %v293
    %v374 = vxor.u32 %v373, 2147483648
    %v375 = vmul.f32 %v374, 1.442695
    %v376 = vpow.pop %v375
    %v377 = vadd.f32 %v376, 1.0
    %v378 = vrcp.pop %v377
    %v379 = vmul.f32 1.0, %v378
    %v380 = vmul.f32 %v379, %v289
    %381 = vmatprep.subr.mxu0 0.0
    %382 = vmatpush1.msra.mxu0 %v109
    %383 = vmatprep.subr.mxu0 0.0
    %384 = vmatpush1.msra.mxu0 %v110
    %385 = vmatprep.subr.mxu0 0.0
    %386 = vmatpush1.msra.mxu0 %v111
    %387 = vmatprep.subr.mxu0 0.0
    %388 = vmatpush1.msra.mxu0 %v112
    %389 = vmatprep.subr.mxu0 0.0
    %390 = vmatpush1.msra.mxu0 %v113
    %391 = vmatprep.subr.mxu0 0.0
    %392 = vmatpush1.msra.mxu0 %v114
    %393 = vmatprep.subr.mxu0 0.0
    %394 = vmatpush1.msra.mxu0 %v115
    %395 = vmatprep.subr.mxu0 0.0
    %396 = vmatpush1.msra.mxu0 %v116
    %397 = vmatprep.subr.mxu0 0.0
    %398 = vmatpush1.msra.mxu0 %v117
    %399 = vmatprep.subr.mxu0 0.0
    %400 = vmatpush1.msra.mxu0 %v118
    %401 = vmatprep.subr.mxu0 0.0
    %402 = vmatpush1.msra.mxu0 %v119
    %403 = vmatprep.subr.mxu0 0.0
    %404 = vmatpush1.msra.mxu0 %v120
    %405 = vmatprep.subr.mxu0 0.0
    %406 = vmatpush1.msra.mxu0 %v121
    %407 = vmatprep.subr.mxu0 0.0
    %408 = vmatpush1.msra.mxu0 %v122
    %409 = vmatprep.subr.mxu0 0.0
    %410 = vmatpush1.msra.mxu0 %v123
    %411 = vmatprep.subr.mxu0 0.0
    %412 = vmatpush1.msra.mxu0 %v124
    %413 = vmatprep.subr.mxu0 0.0
    %414 = vmatpush1.msra.mxu0 0.0
    %415 = vmatprep.subr.mxu0 0.0
    %416 = vmatpush1.msra.mxu0 0.0
    %417 = vmatprep.subr.mxu0 0.0
    %418 = vmatpush1.msra.mxu0 0.0
    %419 = vmatprep.subr.mxu0 0.0
    %420 = vmatpush1.msra.mxu0 0.0
    %421 = vmatprep.subr.mxu0 0.0
    %422 = vmatpush1.msra.mxu0 0.0
    %423 = vmatprep.subr.mxu0 0.0
    %424 = vmatpush1.msra.mxu0 0.0
    %425 = vmatprep.subr.mxu0 0.0
    %426 = vmatpush1.msra.mxu0 0.0
    %427 = vmatprep.subr.mxu0 0.0
    %428 = vmatpush1.msra.mxu0 0.0
    %429 = vmatprep.subr.mxu0 0.0
    %430 = vmatpush1.msra.mxu0 0.0
    %431 = vmatprep.subr.mxu0 0.0
    %432 = vmatpush1.msra.mxu0 0.0
    %433 = vmatprep.subr.mxu0 0.0
    %434 = vmatpush1.msra.mxu0 0.0
    %435 = vmatprep.subr.mxu0 0.0
    %436 = vmatpush1.msra.mxu0 0.0
    %437 = vmatprep.subr.mxu0 0.0
    %438 = vmatpush1.msra.mxu0 0.0
    %439 = vmatprep.subr.mxu0 0.0
    %440 = vmatpush1.msra.mxu0 0.0
    %441 = vmatprep.subr.mxu0 0.0
    %442 = vmatpush1.msra.mxu0 0.0
    %443 = vmatprep.subr.mxu0 0.0
    %444 = vmatpush1.msra.mxu0 0.0
    %445 = vmatprep.mubr.f32.mxu0 0.0
    %446 = vmatmul.mubr.f32.gmra.mrb[0].mxu0 %v380
    %v447 = vpop.f32.mrb[0].mxu0
    %v448 = vadd.f32 %v294, %v447
    %v449 = vpop.f32.mrb[0].mxu0
    %450 = vdwg.mxu0
    %v451 = vtanh.pop %v448
    %v452 = vsub.f32 1.0, %v372
    %v453 = vmul.f32 %v452, %v289
    %v454 = vmul.f32 %v372, %v451
    %v455 = vadd.f32 %v453, %v454
    %s456 = scalar_lea.vmem [#allocation11], 8
    %457 = vst [vmem:[%s456] sm:$0xff] %v455
    %s458 = scalar_lea.vmem [#allocation3], 48
    %v459 = vld [vmem:[%s458] sm:$0xff]
    %v460 = vld [vmem:[%s458 + $0x8] sm:$0xff]
    %v461 = vld [vmem:[%s458 + $0x10] sm:$0xff]
    %462 = vmatprep.subr.mxu0 %v78
    %463 = vmatpush1.msra.mxu0 %v77
    %464 = vmatprep.subr.mxu0 %v80
    %465 = vmatpush1.msra.mxu0 %v79
    %466 = vmatprep.subr.mxu0 %v82
    %467 = vmatpush1.msra.mxu0 %v81
    %468 = vmatprep.subr.mxu0 %v84
    %469 = vmatpush1.msra.mxu0 %v83
    %470 = vmatprep.subr.mxu0 %v86
    %471 = vmatpush1.msra.mxu0 %v85
    %472 = vmatprep.subr.mxu0 %v88
    %473 = vmatpush1.msra.mxu0 %v87
    %474 = vmatprep.subr.mxu0 %v90
    %475 = vmatpush1.msra.mxu0 %v89
    %476 = vmatprep.subr.mxu0 %v92
    %477 = vmatpush1.msra.mxu0 %v91
    %478 = vmatprep.subr.mxu0 %v94
    %479 = vmatpush1.msra.mxu0 %v93
    %480 = vmatprep.subr.mxu0 %v96
    %481 = vmatpush1.msra.mxu0 %v95
    %482 = vmatprep.subr.mxu0 %v98
    %483 = vmatpush1.msra.mxu0 %v97
    %484 = vmatprep.subr.mxu0 %v100
    %485 = vmatpush1.msra.mxu0 %v99
    %486 = vmatprep.subr.mxu0 %v102
    %487 = vmatpush1.msra.mxu0 %v101
    %488 = vmatprep.subr.mxu0 %v104
    %489 = vmatpush1.msra.mxu0 %v103
    %490 = vmatprep.subr.mxu0 %v106
    %491 = vmatpush1.msra.mxu0 %v105
    %492 = vmatprep.subr.mxu0 %v108
    %493 = vmatpush1.msra.mxu0 %v107
    %494 = vmatprep.subr.mxu0 0.0
    %495 = vmatpush1.msra.mxu0 0.0
    %496 = vmatprep.subr.mxu0 0.0
    %497 = vmatpush1.msra.mxu0 0.0
    %498 = vmatprep.subr.mxu0 0.0
    %499 = vmatpush1.msra.mxu0 0.0
    %500 = vmatprep.subr.mxu0 0.0
    %501 = vmatpush1.msra.mxu0 0.0
    %502 = vmatprep.subr.mxu0 0.0
    %503 = vmatpush1.msra.mxu0 0.0
    %504 = vmatprep.subr.mxu0 0.0
    %505 = vmatpush1.msra.mxu0 0.0
    %506 = vmatprep.subr.mxu0 0.0
    %507 = vmatpush1.msra.mxu0 0.0
    %508 = vmatprep.subr.mxu0 0.0
    %509 = vmatpush1.msra.mxu0 0.0
    %510 = vmatprep.subr.mxu0 0.0
    %511 = vmatpush1.msra.mxu0 0.0
    %512 = vmatprep.subr.mxu0 0.0
    %513 = vmatpush1.msra.mxu0 0.0
    %514 = vmatprep.subr.mxu0 0.0
    %515 = vmatpush1.msra.mxu0 0.0
    %516 = vmatprep.subr.mxu0 0.0
    %517 = vmatpush1.msra.mxu0 0.0
    %518 = vmatprep.subr.mxu0 0.0
    %519 = vmatpush1.msra.mxu0 0.0
    %520 = vmatprep.subr.mxu0 0.0
    %521 = vmatpush1.msra.mxu0 0.0
    %522 = vmatprep.subr.mxu0 0.0
    %523 = vmatpush1.msra.mxu0 0.0
    %524 = vmatprep.subr.mxu0 0.0
    %525 = vmatpush1.msra.mxu0 0.0
    %526 = vmatprep.mubr.f32.mxu0 0.0
    %527 = vmatmul.mubr.f32.gmra.mrb[0].mxu0 %v455
    %v528 = vpop.f32.mrb[0].mxu0
    %v529 = vadd.f32 0.0, %v528
    %v530 = vpop.f32.mrb[0].mxu0
    %v531 = vadd.f32 0.0, %v530
    %532 = vdwg.mxu0
    %v533 = vadd.f32 %v529, %v459
    %v534 = vxor.u32 %v533, 2147483648
    %v535 = vmul.f32 %v534, 1.442695
    %v536 = vpow.pop %v535
    %v537 = vadd.f32 %v536, 1.0
    %v538 = vrcp.pop %v537
    %v539 = vmul.f32 1.0, %v538
    %v540 = vadd.f32 %v531, %v460
    %v541 = vxor.u32 %v540, 2147483648
    %v542 = vmul.f32 %v541, 1.442695
    %v543 = vpow.pop %v542
    %v544 = vadd.f32 %v543, 1.0
    %v545 = vrcp.pop %v544
    %v546 = vmul.f32 1.0, %v545
    %v547 = vmul.f32 %v546, %v455
    %548 = vmatprep.subr.mxu0 0.0
    %549 = vmatpush1.msra.mxu0 %v109
    %550 = vmatprep.subr.mxu0 0.0
    %551 = vmatpush1.msra.mxu0 %v110
    %552 = vmatprep.subr.mxu0 0.0
    %553 = vmatpush1.msra.mxu0 %v111
    %554 = vmatprep.subr.mxu0 0.0
    %555 = vmatpush1.msra.mxu0 %v112
    %556 = vmatprep.subr.mxu0 0.0
    %557 = vmatpush1.msra.mxu0 %v113
    %558 = vmatprep.subr.mxu0 0.0
    %559 = vmatpush1.msra.mxu0 %v114
    %560 = vmatprep.subr.mxu0 0.0
    %561 = vmatpush1.msra.mxu0 %v115
    %562 = vmatprep.subr.mxu0 0.0
    %563 = vmatpush1.msra.mxu0 %v116
    %564 = vmatprep.subr.mxu0 0.0
    %565 = vmatpush1.msra.mxu0 %v117
    %566 = vmatprep.subr.mxu0 0.0
    %567 = vmatpush1.msra.mxu0 %v118
    %568 = vmatprep.subr.mxu0 0.0
    %569 = vmatpush1.msra.mxu0 %v119
    %570 = vmatprep.subr.mxu0 0.0
    %571 = vmatpush1.msra.mxu0 %v120
    %572 = vmatprep.subr.mxu0 0.0
    %573 = vmatpush1.msra.mxu0 %v121
    %574 = vmatprep.subr.mxu0 0.0
    %575 = vmatpush1.msra.mxu0 %v122
    %576 = vmatprep.subr.mxu0 0.0
    %577 = vmatpush1.msra.mxu0 %v123
    %578 = vmatprep.subr.mxu0 0.0
    %579 = vmatpush1.msra.mxu0 %v124
    %580 = vmatprep.subr.mxu0 0.0
    %581 = vmatpush1.msra.mxu0 0.0
    %582 = vmatprep.subr.mxu0 0.0
    %583 = vmatpush1.msra.mxu0 0.0
    %584 = vmatprep.subr.mxu0 0.0
    %585 = vmatpush1.msra.mxu0 0.0
    %586 = vmatprep.subr.mxu0 0.0
    %587 = vmatpush1.msra.mxu0 0.0
    %588 = vmatprep.subr.mxu0 0.0
    %589 = vmatpush1.msra.mxu0 0.0
    %590 = vmatprep.subr.mxu0 0.0
    %591 = vmatpush1.msra.mxu0 0.0
    %592 = vmatprep.subr.mxu0 0.0
    %593 = vmatpush1.msra.mxu0 0.0
    %594 = vmatprep.subr.mxu0 0.0
    %595 = vmatpush1.msra.mxu0 0.0
    %596 = vmatprep.subr.mxu0 0.0
    %597 = vmatpush1.msra.mxu0 0.0
    %598 = vmatprep.subr.mxu0 0.0
    %599 = vmatpush1.msra.mxu0 0.0
    %600 = vmatprep.subr.mxu0 0.0
    %601 = vmatpush1.msra.mxu0 0.0
    %602 = vmatprep.subr.mxu0 0.0
    %603 = vmatpush1.msra.mxu0 0.0
    %604 = vmatprep.subr.mxu0 0.0
    %605 = vmatpush1.msra.mxu0 0.0
    %606 = vmatprep.subr.mxu0 0.0
    %607 = vmatpush1.msra.mxu0 0.0
    %608 = vmatprep.subr.mxu0 0.0
    %609 = vmatpush1.msra.mxu0 0.0
    %610 = vmatprep.subr.mxu0 0.0
    %611 = vmatpush1.msra.mxu0 0.0
    %612 = vmatprep.mubr.f32.mxu0 0.0
    %613 = vmatmul.mubr.f32.gmra.mrb[0].mxu0 %v547
    %v614 = vpop.f32.mrb[0].mxu0
    %v615 = vadd.f32 %v461, %v614
    %v616 = vpop.f32.mrb[0].mxu0
    %617 = vdwg.mxu0
    %v618 = vtanh.pop %v615
    %v619 = vsub.f32 1.0, %v539
    %v620 = vmul.f32 %v619, %v455
    %v621 = vmul.f32 %v539, %v618
    %v622 = vadd.f32 %v620, %v621
    %s623 = scalar_lea.vmem [#allocation11], 16
    %624 = vst [vmem:[%s623] sm:$0xff] %v622
    %s625 = scalar_lea.vmem [#allocation3], 72
    %v626 = vld [vmem:[%s625] sm:$0xff]
    %v627 = vld [vmem:[%s625 + $0x8] sm:$0xff]
    %v628 = vld [vmem:[%s625 + $0x10] sm:$0xff]
    %629 = vmatprep.subr.mxu0 %v78
    %630 = vmatpush1.msra.mxu0 %v77
    %631 = vmatprep.subr.mxu0 %v80
    %632 = vmatpush1.msra.mxu0 %v79
    %633 = vmatprep.subr.mxu0 %v82
    %634 = vmatpush1.msra.mxu0 %v81
    %635 = vmatprep.subr.mxu0 %v84
    %636 = vmatpush1.msra.mxu0 %v83
    %637 = vmatprep.subr.mxu0 %v86
    %638 = vmatpush1.msra.mxu0 %v85
    %639 = vmatprep.subr.mxu0 %v88
    %640 = vmatpush1.msra.mxu0 %v87
    %641 = vmatprep.subr.mxu0 %v90
    %642 = vmatpush1.msra.mxu0 %v89
    %643 = vmatprep.subr.mxu0 %v92
    %644 = vmatpush1.msra.mxu0 %v91
    %645 = vmatprep.subr.mxu0 %v94
    %646 = vmatpush1.msra.mxu0 %v93
    %647 = vmatprep.subr.mxu0 %v96
    %648 = vmatpush1.msra.mxu0 %v95
    %649 = vmatprep.subr.mxu0 %v98
    %650 = vmatpush1.msra.mxu0 %v97
    %651 = vmatprep.subr.mxu0 %v100
    %652 = vmatpush1.msra.mxu0 %v99
    %653 = vmatprep.subr.mxu0 %v102
    %654 = vmatpush1.msra.mxu0 %v101
    %655 = vmatprep.subr.mxu0 %v104
    %656 = vmatpush1.msra.mxu0 %v103
    %657 = vmatprep.subr.mxu0 %v106
    %658 = vmatpush1.msra.mxu0 %v105
    %659 = vmatprep.subr.mxu0 %v108
    %660 = vmatpush1.msra.mxu0 %v107
    %661 = vmatprep.subr.mxu0 0.0
    %662 = vmatpush1.msra.mxu0 0.0
    %663 = vmatprep.subr.mxu0 0.0
    %664 = vmatpush1.msra.mxu0 0.0
    %665 = vmatprep.subr.mxu0 0.0
    %666 = vmatpush1.msra.mxu0 0.0
    %667 = vmatprep.subr.mxu0 0.0
    %668 = vmatpush1.msra.mxu0 0.0
    %669 = vmatprep.subr.mxu0 0.0
    %670 = vmatpush1.msra.mxu0 0.0
    %671 = vmatprep.subr.mxu0 0.0
    %672 = vmatpush1.msra.mxu0 0.0
    %673 = vmatprep.subr.mxu0 0.0
    %674 = vmatpush1.msra.mxu0 0.0
    %675 = vmatprep.subr.mxu0 0.0
    %676 = vmatpush1.msra.mxu0 0.0
    %677 = vmatprep.subr.mxu0 0.0
    %678 = vmatpush1.msra.mxu0 0.0
    %679 = vmatprep.subr.mxu0 0.0
    %680 = vmatpush1.msra.mxu0 0.0
    %681 = vmatprep.subr.mxu0 0.0
    %682 = vmatpush1.msra.mxu0 0.0
    %683 = vmatprep.subr.mxu0 0.0
    %684 = vmatpush1.msra.mxu0 0.0
    %685 = vmatprep.subr.mxu0 0.0
    %686 = vmatpush1.msra.mxu0 0.0
    %687 = vmatprep.subr.mxu0 0.0
    %688 = vmatpush1.msra.mxu0 0.0
    %689 = vmatprep.subr.mxu0 0.0
    %690 = vmatpush1.msra.mxu0 0.0
    %691 = vmatprep.subr.mxu0 0.0
    %692 = vmatpush1.msra.mxu0 0.0
    %693 = vmatprep.mubr.f32.mxu0 0.0
    %694 = vmatmul.mubr.f32.gmra.mrb[0].mxu0 %v622
    %v695 = vpop.f32.mrb[0].mxu0
    %v696 = vadd.f32 0.0, %v695
    %v697 = vpop.f32.mrb[0].mxu0
    %v698 = vadd.f32 0.0, %v697
    %699 = vdwg.mxu0
    %v700 = vadd.f32 %v696, %v626
    %v701 = vxor.u32 %v700, 2147483648
    %v702 = vmul.f32 %v701, 1.442695
    %v703 = vpow.pop %v702
    %v704 = vadd.f32 %v703, 1.0
    %v705 = vrcp.pop %v704
    %v706 = vmul.f32 1.0, %v705
    %v707 = vadd.f32 %v698, %v627
    %v708 = vxor.u32 %v707, 2147483648
    %v709 = vmul.f32 %v708, 1.442695
    %v710 = vpow.pop %v709
    %v711 = vadd.f32 %v710, 1.0
    %v712 = vrcp.pop %v711
    %v713 = vmul.f32 1.0, %v712
    %v714 = vmul.f32 %v713, %v622
    %715 = vmatprep.subr.mxu0 0.0
    %716 = vmatpush1.msra.mxu0 %v109
    %717 = vmatprep.subr.mxu0 0.0
    %718 = vmatpush1.msra.mxu0 %v110
    %719 = vmatprep.subr.mxu0 0.0
    %720 = vmatpush1.msra.mxu0 %v111
    %721 = vmatprep.subr.mxu0 0.0
    %722 = vmatpush1.msra.mxu0 %v112
    %723 = vmatprep.subr.mxu0 0.0
    %724 = vmatpush1.msra.mxu0 %v113
    %725 = vmatprep.subr.mxu0 0.0
    %726 = vmatpush1.msra.mxu0 %v114
    %727 = vmatprep.subr.mxu0 0.0
    %728 = vmatpush1.msra.mxu0 %v115
    %729 = vmatprep.subr.mxu0 0.0
    %730 = vmatpush1.msra.mxu0 %v116
    %731 = vmatprep.subr.mxu0 0.0
    %732 = vmatpush1.msra.mxu0 %v117
    %733 = vmatprep.subr.mxu0 0.0
    %734 = vmatpush1.msra.mxu0 %v118
    %735 = vmatprep.subr.mxu0 0.0
    %736 = vmatpush1.msra.mxu0 %v119
    %737 = vmatprep.subr.mxu0 0.0
    %738 = vmatpush1.msra.mxu0 %v120
    %739 = vmatprep.subr.mxu0 0.0
    %740 = vmatpush1.msra.mxu0 %v121
    %741 = vmatprep.subr.mxu0 0.0
    %742 = vmatpush1.msra.mxu0 %v122
    %743 = vmatprep.subr.mxu0 0.0
    %744 = vmatpush1.msra.mxu0 %v123
    %745 = vmatprep.subr.mxu0 0.0
    %746 = vmatpush1.msra.mxu0 %v124
    %747 = vmatprep.subr.mxu0 0.0
    %748 = vmatpush1.msra.mxu0 0.0
    %749 = vmatprep.subr.mxu0 0.0
    %750 = vmatpush1.msra.mxu0 0.0
    %751 = vmatprep.subr.mxu0 0.0
    %752 = vmatpush1.msra.mxu0 0.0
    %753 = vmatprep.subr.mxu0 0.0
    %754 = vmatpush1.msra.mxu0 0.0
    %755 = vmatprep.subr.mxu0 0.0
    %756 = vmatpush1.msra.mxu0 0.0
    %757 = vmatprep.subr.mxu0 0.0
    %758 = vmatpush1.msra.mxu0 0.0
    %759 = vmatprep.subr.mxu0 0.0
    %760 = vmatpush1.msra.mxu0 0.0
    %761 = vmatprep.subr.mxu0 0.0
    %762 = vmatpush1.msra.mxu0 0.0
    %763 = vmatprep.subr.mxu0 0.0
    %764 = vmatpush1.msra.mxu0 0.0
    %765 = vmatprep.subr.mxu0 0.0
    %766 = vmatpush1.msra.mxu0 0.0
    %767 = vmatprep.subr.mxu0 0.0
    %768 = vmatpush1.msra.mxu0 0.0
    %769 = vmatprep.subr.mxu0 0.0
    %770 = vmatpush1.msra.mxu0 0.0
    %771 = vmatprep.subr.mxu0 0.0
    %772 = vmatpush1.msra.mxu0 0.0
    %773 = vmatprep.subr.mxu0 0.0
    %774 = vmatpush1.msra.mxu0 0.0
    %775 = vmatprep.subr.mxu0 0.0
    %776 = vmatpush1.msra.mxu0 0.0
    %777 = vmatprep.subr.mxu0 0.0
    %778 = vmatpush1.msra.mxu0 0.0
    %779 = vmatprep.mubr.f32.mxu0 0.0
    %780 = vmatmul.mubr.f32.gmra.mrb[0].mxu0 %v714
    %v781 = vpop.f32.mrb[0].mxu0
    %v782 = vadd.f32 %v628, %v781
    %v783 = vpop.f32.mrb[0].mxu0
    %784 = vdwg.mxu0
    %v785 = vtanh.pop %v782
    %v786 = vsub.f32 1.0, %v706
    %v787 = vmul.f32 %v786, %v622
    %v788 = vmul.f32 %v706, %v785
    %v789 = vadd.f32 %v787, %v788
    %s790 = scalar_lea.vmem [#allocation11], 24
    %791 = vst [vmem:[%s790] sm:$0xff] %v789
    %s792 = scalar_lea.vmem [#allocation3], 96
    %v793 = vld [vmem:[%s792] sm:$0xff]
    %v794 = vld [vmem:[%s792 + $0x8] sm:$0xff]
    %v795 = vld [vmem:[%s792 + $0x10] sm:$0xff]
    %796 = vmatprep.subr.mxu0 %v78
    %797 = vmatpush1.msra.mxu0 %v77
    %798 = vmatprep.subr.mxu0 %v80
    %799 = vmatpush1.msra.mxu0 %v79
    %800 = vmatprep.subr.mxu0 %v82
    %801 = vmatpush1.msra.mxu0 %v81
    %802 = vmatprep.subr.mxu0 %v84
    %803 = vmatpush1.msra.mxu0 %v83
    %804 = vmatprep.subr.mxu0 %v86
    %805 = vmatpush1.msra.mxu0 %v85
    %806 = vmatprep.subr.mxu0 %v88
    %807 = vmatpush1.msra.mxu0 %v87
    %808 = vmatprep.subr.mxu0 %v90
    %809 = vmatpush1.msra.mxu0 %v89
    %810 = vmatprep.subr.mxu0 %v92
    %811 = vmatpush1.msra.mxu0 %v91
    %812 = vmatprep.subr.mxu0 %v94
    %813 = vmatpush1.msra.mxu0 %v93
    %814 = vmatprep.subr.mxu0 %v96
    %815 = vmatpush1.msra.mxu0 %v95
    %816 = vmatprep.subr.mxu0 %v98
    %817 = vmatpush1.msra.mxu0 %v97
    %818 = vmatprep.subr.mxu0 %v100
    %819 = vmatpush1.msra.mxu0 %v99
    %820 = vmatprep.subr.mxu0 %v102
    %821 = vmatpush1.msra.mxu0 %v101
    %822 = vmatprep.subr.mxu0 %v104
    %823 = vmatpush1.msra.mxu0 %v103
    %824 = vmatprep.subr.mxu0 %v106
    %825 = vmatpush1.msra.mxu0 %v105
    %826 = vmatprep.subr.mxu0 %v108
    %827 = vmatpush1.msra.mxu0 %v107
    %828 = vmatprep.subr.mxu0 0.0
    %829 = vmatpush1.msra.mxu0 0.0
    %830 = vmatprep.subr.mxu0 0.0
    %831 = vmatpush1.msra.mxu0 0.0
    %832 = vmatprep.subr.mxu0 0.0
    %833 = vmatpush1.msra.mxu0 0.0
    %834 = vmatprep.subr.mxu0 0.0
    %835 = vmatpush1.msra.mxu0 0.0
    %836 = vmatprep.subr.mxu0 0.0
    %837 = vmatpush1.msra.mxu0 0.0
    %838 = vmatprep.subr.mxu0 0.0
    %839 = vmatpush1.msra.mxu0 0.0
    %840 = vmatprep.subr.mxu0 0.0
    %841 = vmatpush1.msra.mxu0 0.0
    %842 = vmatprep.subr.mxu0 0.0
    %843 = vmatpush1.msra.mxu0 0.0
    %844 = vmatprep.subr.mxu0 0.0
    %845 = vmatpush1.msra.mxu0 0.0
    %846 = vmatprep.subr.mxu0 0.0
    %847 = vmatpush1.msra.mxu0 0.0
    %848 = vmatprep.subr.mxu0 0.0
    %849 = vmatpush1.msra.mxu0 0.0
    %850 = vmatprep.subr.mxu0 0.0
    %851 = vmatpush1.msra.mxu0 0.0
    %852 = vmatprep.subr.mxu0 0.0
    %853 = vmatpush1.msra.mxu0 0.0
    %854 = vmatprep.subr.mxu0 0.0
    %855 = vmatpush1.msra.mxu0 0.0
    %856 = vmatprep.subr.mxu0 0.0
    %857 = vmatpush1.msra.mxu0 0.0
    %858 = vmatprep.subr.mxu0 0.0
    %859 = vmatpush1.msra.mxu0 0.0
    %860 = vmatprep.mubr.f32.mxu0 0.0
    %861 = vmatmul.mubr.f32.gmra.mrb[0].mxu0 %v789
    %v862 = vpop.f32.mrb[0].mxu0
    %v863 = vadd.f32 0.0, %v862
    %v864 = vpop.f32.mrb[0].mxu0
    %v865 = vadd.f32 0.0, %v864
    %866 = vdwg.mxu0
    %v867 = vadd.f32 %v863, %v793
    %v868 = vxor.u32 %v867, 2147483648
    %v869 = vmul.f32 %v868, 1.442695
    %v870 = vpow.pop %v869
    %v871 = vadd.f32 %v870, 1.0
    %v872 = vrcp.pop %v871
    %v873 = vmul.f32 1.0, %v872
    %v874 = vadd.f32 %v865, %v794
    %v875 = vxor.u32 %v874, 2147483648
    %v876 = vmul.f32 %v875, 1.442695
    %v877 = vpow.pop %v876
    %v878 = vadd.f32 %v877, 1.0
    %v879 = vrcp.pop %v878
    %v880 = vmul.f32 1.0, %v879
    %v881 = vmul.f32 %v880, %v789
    %882 = vmatprep.subr.mxu0 0.0
    %883 = vmatpush1.msra.mxu0 %v109
    %884 = vmatprep.subr.mxu0 0.0
    %885 = vmatpush1.msra.mxu0 %v110
    %886 = vmatprep.subr.mxu0 0.0
    %887 = vmatpush1.msra.mxu0 %v111
    %888 = vmatprep.subr.mxu0 0.0
    %889 = vmatpush1.msra.mxu0 %v112
    %890 = vmatprep.subr.mxu0 0.0
    %891 = vmatpush1.msra.mxu0 %v113
    %892 = vmatprep.subr.mxu0 0.0
    %893 = vmatpush1.msra.mxu0 %v114
    %894 = vmatprep.subr.mxu0 0.0
    %895 = vmatpush1.msra.mxu0 %v115
    %896 = vmatprep.subr.mxu0 0.0
    %897 = vmatpush1.msra.mxu0 %v116
    %898 = vmatprep.subr.mxu0 0.0
    %899 = vmatpush1.msra.mxu0 %v117
    %900 = vmatprep.subr.mxu0 0.0
    %901 = vmatpush1.msra.mxu0 %v118
    %902 = vmatprep.subr.mxu0 0.0
    %903 = vmatpush1.msra.mxu0 %v119
    %904 = vmatprep.subr.mxu0 0.0
    %905 = vmatpush1.msra.mxu0 %v120
    %906 = vmatprep.subr.mxu0 0.0
    %907 = vmatpush1.msra.mxu0 %v121
    %908 = vmatprep.subr.mxu0 0.0
    %909 = vmatpush1.msra.mxu0 %v122
    %910 = vmatprep.subr.mxu0 0.0
    %911 = vmatpush1.msra.mxu0 %v123
    %912 = vmatprep.subr.mxu0 0.0
    %913 = vmatpush1.msra.mxu0 %v124
    %914 = vmatprep.subr.mxu0 0.0
    %915 = vmatpush1.msra.mxu0 0.0
    %916 = vmatprep.subr.mxu0 0.0
    %917 = vmatpush1.msra.mxu0 0.0
    %918 = vmatprep.subr.mxu0 0.0
    %919 = vmatpush1.msra.mxu0 0.0
    %920 = vmatprep.subr.mxu0 0.0
    %921 = vmatpush1.msra.mxu0 0.0
    %922 = vmatprep.subr.mxu0 0.0
    %923 = vmatpush1.msra.mxu0 0.0
    %924 = vmatprep.subr.mxu0 0.0
    %925 = vmatpush1.msra.mxu0 0.0
    %926 = vmatprep.subr.mxu0 0.0
    %927 = vmatpush1.msra.mxu0 0.0
    %928 = vmatprep.subr.mxu0 0.0
    %929 = vmatpush1.msra.mxu0 0.0
    %930 = vmatprep.subr.mxu0 0.0
    %931 = vmatpush1.msra.mxu0 0.0
    %932 = vmatprep.subr.mxu0 0.0
    %933 = vmatpush1.msra.mxu0 0.0
    %934 = vmatprep.subr.mxu0 0.0
    %935 = vmatpush1.msra.mxu0 0.0
    %936 = vmatprep.subr.mxu0 0.0
    %937 = vmatpush1.msra.mxu0 0.0
    %938 = vmatprep.subr.mxu0 0.0
    %939 = vmatpush1.msra.mxu0 0.0
    %940 = vmatprep.subr.mxu0 0.0
    %941 = vmatpush1.msra.mxu0 0.0
    %942 = vmatprep.subr.mxu0 0.0
    %943 = vmatpush1.msra.mxu0 0.0
    %944 = vmatprep.subr.mxu0 0.0
    %945 = vmatpush1.msra.mxu0 0.0
    %946 = vmatprep.mubr.f32.mxu0 0.0
    %947 = vmatmul.mubr.f32.gmra.mrb[0].mxu0 %v881
    %v948 = vpop.f32.mrb[0].mxu0
    %v949 = vadd.f32 %v795, %v948
    %v950 = vpop.f32.mrb[0].mxu0
    %951 = vdwg.mxu0
    %v952 = vtanh.pop %v949
    %v953 = vsub.f32 1.0, %v873
    %v954 = vmul.f32 %v953, %v789
    %v955 = vmul.f32 %v873, %v952
    %v956 = vadd.f32 %v954, %v955
    %s957 = scalar_lea.vmem [#allocation11], 32
    %958 = vst [vmem:[%s957] sm:$0xff] %v956
    %s959 = scalar_lea.vmem [#allocation3], 120
    %v960 = vld [vmem:[%s959] sm:$0xff]
    %v961 = vld [vmem:[%s959 + $0x8] sm:$0xff]
    %v962 = vld [vmem:[%s959 + $0x10] sm:$0xff]
    %963 = vmatprep.subr.mxu0 %v78
    %964 = vmatpush1.msra.mxu0 %v77
    %965 = vmatprep.subr.mxu0 %v80
    %966 = vmatpush1.msra.mxu0 %v79
    %967 = vmatprep.subr.mxu0 %v82
    %968 = vmatpush1.msra.mxu0 %v81
    %969 = vmatprep.subr.mxu0 %v84
    %970 = vmatpush1.msra.mxu0 %v83
    %971 = vmatprep.subr.mxu0 %v86
    %972 = vmatpush1.msra.mxu0 %v85
    %973 = vmatprep.subr.mxu0 %v88
    %974 = vmatpush1.msra.mxu0 %v87
    %975 = vmatprep.subr.mxu0 %v90
    %976 = vmatpush1.msra.mxu0 %v89
    %977 = vmatprep.subr.mxu0 %v92
    %978 = vmatpush1.msra.mxu0 %v91
    %979 = vmatprep.subr.mxu0 %v94
    %980 = vmatpush1.msra.mxu0 %v93
    %981 = vmatprep.subr.mxu0 %v96
    %982 = vmatpush1.msra.mxu0 %v95
    %983 = vmatprep.subr.mxu0 %v98
    %984 = vmatpush1.msra.mxu0 %v97
    %985 = vmatprep.subr.mxu0 %v100
    %986 = vmatpush1.msra.mxu0 %v99
    %987 = vmatprep.subr.mxu0 %v102
    %988 = vmatpush1.msra.mxu0 %v101
    %989 = vmatprep.subr.mxu0 %v104
    %990 = vmatpush1.msra.mxu0 %v103
    %991 = vmatprep.subr.mxu0 %v106
    %992 = vmatpush1.msra.mxu0 %v105
    %993 = vmatprep.subr.mxu0 %v108
    %994 = vmatpush1.msra.mxu0 %v107
    %995 = vmatprep.subr.mxu0 0.0
    %996 = vmatpush1.msra.mxu0 0.0
    %997 = vmatprep.subr.mxu0 0.0
    %998 = vmatpush1.msra.mxu0 0.0
    %999 = vmatprep.subr.mxu0 0.0
    %1000 = vmatpush1.msra.mxu0 0.0
    %1001 = vmatprep.subr.mxu0 0.0
    %1002 = vmatpush1.msra.mxu0 0.0
    %1003 = vmatprep.subr.mxu0 0.0
    %1004 = vmatpush1.msra.mxu0 0.0
    %1005 = vmatprep.subr.mxu0 0.0
    %1006 = vmatpush1.msra.mxu0 0.0
    %1007 = vmatprep.subr.mxu0 0.0
    %1008 = vmatpush1.msra.mxu0 0.0
    %1009 = vmatprep.subr.mxu0 0.0
    %1010 = vmatpush1.msra.mxu0 0.0
    %1011 = vmatprep.subr.mxu0 0.0
    %1012 = vmatpush1.msra.mxu0 0.0
    %1013 = vmatprep.subr.mxu0 0.0
    %1014 = vmatpush1.msra.mxu0 0.0
    %1015 = vmatprep.subr.mxu0 0.0
    %1016 = vmatpush1.msra.mxu0 0.0
    %1017 = vmatprep.subr.mxu0 0.0
    %1018 = vmatpush1.msra.mxu0 0.0
    %1019 = vmatprep.subr.mxu0 0.0
    %1020 = vmatpush1.msra.mxu0 0.0
    %1021 = vmatprep.subr.mxu0 0.0
    %1022 = vmatpush1.msra.mxu0 0.0
    %1023 = vmatprep.subr.mxu0 0.0
    %1024 = vmatpush1.msra.mxu0 0.0
    %1025 = vmatprep.subr.mxu0 0.0
    %1026 = vmatpush1.msra.mxu0 0.0
    %1027 = vmatprep.mubr.f32.mxu0 0.0
    %1028 = vmatmul.mubr.f32.gmra.mrb[0].mxu0 %v956
    %v1029 = vpop.f32.mrb[0].mxu0
    %v1030 = vadd.f32 0.0, %v1029
    %v1031 = vpop.f32.mrb[0].mxu0
    %v1032 = vadd.f32 0.0, %v1031
    %1033 = vdwg.mxu0
    %v1034 = vadd.f32 %v1030, %v960
    %v1035 = vxor.u32 %v1034, 2147483648
    %v1036 = vmul.f32 %v1035, 1.442695
    %v1037 = vpow.pop %v1036
    %v1038 = vadd.f32 %v1037, 1.0
    %v1039 = vrcp.pop %v1038
    %v1040 = vmul.f32 1.0, %v1039
    %v1041 = vadd.f32 %v1032, %v961
    %v1042 = vxor.u32 %v1041, 2147483648
    %v1043 = vmul.f32 %v1042, 1.442695
    %v1044 = vpow.pop %v1043
    %v1045 = vadd.f32 %v1044, 1.0
    %v1046 = vrcp.pop %v1045
    %v1047 = vmul.f32 1.0, %v1046
    %v1048 = vmul.f32 %v1047, %v956
    %1049 = vmatprep.subr.mxu0 0.0
    %1050 = vmatpush1.msra.mxu0 %v109
    %1051 = vmatprep.subr.mxu0 0.0
    %1052 = vmatpush1.msra.mxu0 %v110
    %1053 = vmatprep.subr.mxu0 0.0
    %1054 = vmatpush1.msra.mxu0 %v111
    %1055 = vmatprep.subr.mxu0 0.0
    %1056 = vmatpush1.msra.mxu0 %v112
    %1057 = vmatprep.subr.mxu0 0.0
    %1058 = vmatpush1.msra.mxu0 %v113
    %1059 = vmatprep.subr.mxu0 0.0
    %1060 = vmatpush1.msra.mxu0 %v114
    %1061 = vmatprep.subr.mxu0 0.0
    %1062 = vmatpush1.msra.mxu0 %v115
    %1063 = vmatprep.subr.mxu0 0.0
    %1064 = vmatpush1.msra.mxu0 %v116
    %1065 = vmatprep.subr.mxu0 0.0
    %1066 = vmatpush1.msra.mxu0 %v117
    %1067 = vmatprep.subr.mxu0 0.0
    %1068 = vmatpush1.msra.mxu0 %v118
    %1069 = vmatprep.subr.mxu0 0.0
    %1070 = vmatpush1.msra.mxu0 %v119
    %1071 = vmatprep.subr.mxu0 0.0
    %1072 = vmatpush1.msra.mxu0 %v120
    %1073 = vmatprep.subr.mxu0 0.0
    %1074 = vmatpush1.msra.mxu0 %v121
    %1075 = vmatprep.subr.mxu0 0.0
    %1076 = vmatpush1.msra.mxu0 %v122
    %1077 = vmatprep.subr.mxu0 0.0
    %1078 = vmatpush1.msra.mxu0 %v123
    %1079 = vmatprep.subr.mxu0 0.0
    %1080 = vmatpush1.msra.mxu0 %v124
    %1081 = vmatprep.subr.mxu0 0.0
    %1082 = vmatpush1.msra.mxu0 0.0
    %1083 = vmatprep.subr.mxu0 0.0
    %1084 = vmatpush1.msra.mxu0 0.0
    %1085 = vmatprep.subr.mxu0 0.0
    %1086 = vmatpush1.msra.mxu0 0.0
    %1087 = vmatprep.subr.mxu0 0.0
    %1088 = vmatpush1.msra.mxu0 0.0
    %1089 = vmatprep.subr.mxu0 0.0
    %1090 = vmatpush1.msra.mxu0 0.0
    %1091 = vmatprep.subr.mxu0 0.0
    %1092 = vmatpush1.msra.mxu0 0.0
    %1093 = vmatprep.subr.mxu0 0.0
    %1094 = vmatpush1.msra.mxu0 0.0
    %1095 = vmatprep.subr.mxu0 0.0
    %1096 = vmatpush1.msra.mxu0 0.0
    %1097 = vmatprep.subr.mxu0 0.0
    %1098 = vmatpush1.msra.mxu0 0.0
    %1099 = vmatprep.subr.mxu0 0.0
    %1100 = vmatpush1.msra.mxu0 0.0
    %1101 = vmatprep.subr.mxu0 0.0
    %1102 = vmatpush1.msra.mxu0 0.0
    %1103 = vmatprep.subr.mxu0 0.0
    %1104 = vmatpush1.msra.mxu0 0.0
    %1105 = vmatprep.subr.mxu0 0.0
    %1106 = vmatpush1.msra.mxu0 0.0
    %1107 = vmatprep.subr.mxu0 0.0
    %1108 = vmatpush1.msra.mxu0 0.0
    %1109 = vmatprep.subr.mxu0 0.0
    %1110 = vmatpush1.msra.mxu0 0.0
    %1111 = vmatprep.subr.mxu0 0.0
    %1112 = vmatpush1.msra.mxu0 0.0
    %1113 = vmatprep.mubr.f32.mxu0 0.0
    %1114 = vmatmul.mubr.f32.gmra.mrb[0].mxu0 %v1048
    %v1115 = vpop.f32.mrb[0].mxu0
    %v1116 = vadd.f32 %v962, %v1115
    %v1117 = vpop.f32.mrb[0].mxu0
    %1118 = vdwg.mxu0
    %v1119 = vtanh.pop %v1116
    %v1120 = vsub.f32 1.0, %v1040
    %v1121 = vmul.f32 %v1120, %v956
    %v1122 = vmul.f32 %v1040, %v1119
    %v1123 = vadd.f32 %v1121, %v1122
    %s1124 = scalar_lea.vmem [#allocation11], 40
    %1125 = vst [vmem:[%s1124] sm:$0xff] %v1123
    %s1126 = scalar_lea.vmem [#allocation3], 144
    %v1127 = vld [vmem:[%s1126] sm:$0xff]
    %v1128 = vld [vmem:[%s1126 + $0x8] sm:$0xff]
    %v1129 = vld [vmem:[%s1126 + $0x10] sm:$0xff]
    %1130 = vmatprep.subr.mxu0 %v78
    %1131 = vmatpush1.msra.mxu0 %v77
    %1132 = vmatprep.subr.mxu0 %v80
    %1133 = vmatpush1.msra.mxu0 %v79
    %1134 = vmatprep.subr.mxu0 %v82
    %1135 = vmatpush1.msra.mxu0 %v81
    %1136 = vmatprep.subr.mxu0 %v84
    %1137 = vmatpush1.msra.mxu0 %v83
    %1138 = vmatprep.subr.mxu0 %v86
    %1139 = vmatpush1.msra.mxu0 %v85
    %1140 = vmatprep.subr.mxu0 %v88
    %1141 = vmatpush1.msra.mxu0 %v87
    %1142 = vmatprep.subr.mxu0 %v90
    %1143 = vmatpush1.msra.mxu0 %v89
    %1144 = vmatprep.subr.mxu0 %v92
    %1145 = vmatpush1.msra.mxu0 %v91
    %1146 = vmatprep.subr.mxu0 %v94
    %1147 = vmatpush1.msra.mxu0 %v93
    %1148 = vmatprep.subr.mxu0 %v96
    %1149 = vmatpush1.msra.mxu0 %v95
    %1150 = vmatprep.subr.mxu0 %v98
    %1151 = vmatpush1.msra.mxu0 %v97
    %1152 = vmatprep.subr.mxu0 %v100
    %1153 = vmatpush1.msra.mxu0 %v99
    %1154 = vmatprep.subr.mxu0 %v102
    %1155 = vmatpush1.msra.mxu0 %v101
    %1156 = vmatprep.subr.mxu0 %v104
    %1157 = vmatpush1.msra.mxu0 %v103
    %1158 = vmatprep.subr.mxu0 %v106
    %1159 = vmatpush1.msra.mxu0 %v105
    %1160 = vmatprep.subr.mxu0 %v108
    %1161 = vmatpush1.msra.mxu0 %v107
    %1162 = vmatprep.subr.mxu0 0.0
    %1163 = vmatpush1.msra.mxu0 0.0
    %1164 = vmatprep.subr.mxu0 0.0
    %1165 = vmatpush1.msra.mxu0 0.0
    %1166 = vmatprep.subr.mxu0 0.0
    %1167 = vmatpush1.msra.mxu0 0.0
    %1168 = vmatprep.subr.mxu0 0.0
    %1169 = vmatpush1.msra.mxu0 0.0
    %1170 = vmatprep.subr.mxu0 0.0
    %1171 = vmatpush1.msra.mxu0 0.0
    %1172 = vmatprep.subr.mxu0 0.0
    %1173 = vmatpush1.msra.mxu0 0.0
    %1174 = vmatprep.subr.mxu0 0.0
    %1175 = vmatpush1.msra.mxu0 0.0
    %1176 = vmatprep.subr.mxu0 0.0
    %1177 = vmatpush1.msra.mxu0 0.0
    %1178 = vmatprep.subr.mxu0 0.0
    %1179 = vmatpush1.msra.mxu0 0.0
    %1180 = vmatprep.subr.mxu0 0.0
    %1181 = vmatpush1.msra.mxu0 0.0
    %1182 = vmatprep.subr.mxu0 0.0
    %1183 = vmatpush1.msra.mxu0 0.0
    %1184 = vmatprep.subr.mxu0 0.0
    %1185 = vmatpush1.msra.mxu0 0.0
    %1186 = vmatprep.subr.mxu0 0.0
    %1187 = vmatpush1.msra.mxu0 0.0
    %1188 = vmatprep.subr.mxu0 0.0
    %1189 = vmatpush1.msra.mxu0 0.0
    %1190 = vmatprep.subr.mxu0 0.0
    %1191 = vmatpush1.msra.mxu0 0.0
    %1192 = vmatprep.subr.mxu0 0.0
    %1193 = vmatpush1.msra.mxu0 0.0
    %1194 = vmatprep.mubr.f32.mxu0 0.0
    %1195 = vmatmul.mubr.f32.gmra.mrb[0].mxu0 %v1123
    %v1196 = vpop.f32.mrb[0].mxu0
    %v1197 = vadd.f32 0.0, %v1196
    %v1198 = vpop.f32.mrb[0].mxu0
    %v1199 = vadd.f32 0.0, %v1198
    %1200 = vdwg.mxu0
    %v1201 = vadd.f32 %v1197, %v1127
    %v1202 = vxor.u32 %v1201, 2147483648
    %v1203 = vmul.f32 %v1202, 1.442695
    %v1204 = vpow.pop %v1203
    %v1205 = vadd.f32 %v1204, 1.0
    %v1206 = vrcp.pop %v1205
    %v1207 = vmul.f32 1.0, %v1206
    %v1208 = vadd.f32 %v1199, %v1128
    %v1209 = vxor.u32 %v1208, 2147483648
    %v1210 = vmul.f32 %v1209, 1.442695
    %v1211 = vpow.pop %v1210
    %v1212 = vadd.f32 %v1211, 1.0
    %v1213 = vrcp.pop %v1212
    %v1214 = vmul.f32 1.0, %v1213
    %v1215 = vmul.f32 %v1214, %v1123
    %1216 = vmatprep.subr.mxu0 0.0
    %1217 = vmatpush1.msra.mxu0 %v109
    %1218 = vmatprep.subr.mxu0 0.0
    %1219 = vmatpush1.msra.mxu0 %v110
    %1220 = vmatprep.subr.mxu0 0.0
    %1221 = vmatpush1.msra.mxu0 %v111
    %1222 = vmatprep.subr.mxu0 0.0
    %1223 = vmatpush1.msra.mxu0 %v112
    %1224 = vmatprep.subr.mxu0 0.0
    %1225 = vmatpush1.msra.mxu0 %v113
    %1226 = vmatprep.subr.mxu0 0.0
    %1227 = vmatpush1.msra.mxu0 %v114
    %1228 = vmatprep.subr.mxu0 0.0
    %1229 = vmatpush1.msra.mxu0 %v115
    %1230 = vmatprep.subr.mxu0 0.0
    %1231 = vmatpush1.msra.mxu0 %v116
    %1232 = vmatprep.subr.mxu0 0.0
    %1233 = vmatpush1.msra.mxu0 %v117
    %1234 = vmatprep.subr.mxu0 0.0
    %1235 = vmatpush1.msra.mxu0 %v118
    %1236 = vmatprep.subr.mxu0 0.0
    %1237 = vmatpush1.msra.mxu0 %v119
    %1238 = vmatprep.subr.mxu0 0.0
    %1239 = vmatpush1.msra.mxu0 %v120
    %1240 = vmatprep.subr.mxu0 0.0
    %1241 = vmatpush1.msra.mxu0 %v121
    %1242 = vmatprep.subr.mxu0 0.0
    %1243 = vmatpush1.msra.mxu0 %v122
    %1244 = vmatprep.subr.mxu0 0.0
    %1245 = vmatpush1.msra.mxu0 %v123
    %1246 = vmatprep.subr.mxu0 0.0
    %1247 = vmatpush1.msra.mxu0 %v124
    %1248 = vmatprep.subr.mxu0 0.0
    %1249 = vmatpush1.msra.mxu0 0.0
    %1250 = vmatprep.subr.mxu0 0.0
    %1251 = vmatpush1.msra.mxu0 0.0
    %1252 = vmatprep.subr.mxu0 0.0
    %1253 = vmatpush1.msra.mxu0 0.0
    %1254 = vmatprep.subr.mxu0 0.0
    %1255 = vmatpush1.msra.mxu0 0.0
    %1256 = vmatprep.subr.mxu0 0.0
    %1257 = vmatpush1.msra.mxu0 0.0
    %1258 = vmatprep.subr.mxu0 0.0
    %1259 = vmatpush1.msra.mxu0 0.0
    %1260 = vmatprep.subr.mxu0 0.0
    %1261 = vmatpush1.msra.mxu0 0.0
    %1262 = vmatprep.subr.mxu0 0.0
    %1263 = vmatpush1.msra.mxu0 0.0
    %1264 = vmatprep.subr.mxu0 0.0
    %1265 = vmatpush1.msra.mxu0 0.0
    %1266 = vmatprep.subr.mxu0 0.0
    %1267 = vmatpush1.msra.mxu0 0.0
    %1268 = vmatprep.subr.mxu0 0.0
    %1269 = vmatpush1.msra.mxu0 0.0
    %1270 = vmatprep.subr.mxu0 0.0
    %1271 = vmatpush1.msra.mxu0 0.0
    %1272 = vmatprep.subr.mxu0 0.0
    %1273 = vmatpush1.msra.mxu0 0.0
    %1274 = vmatprep.subr.mxu0 0.0
    %1275 = vmatpush1.msra.mxu0 0.0
    %1276 = vmatprep.subr.mxu0 0.0
    %1277 = vmatpush1.msra.mxu0 0.0
    %1278 = vmatprep.subr.mxu0 0.0
    %1279 = vmatpush1.msra.mxu0 0.0
    %1280 = vmatprep.mubr.f32.mxu0 0.0
    %1281 = vmatmul.mubr.f32.gmra.mrb[0].mxu0 %v1215
    %v1282 = vpop.f32.mrb[0].mxu0
    %v1283 = vadd.f32 %v1129, %v1282
    %v1284 = vpop.f32.mrb[0].mxu0
    %1285 = vdwg.mxu0
    %v1286 = vtanh.pop %v1283
    %v1287 = vsub.f32 1.0, %v1207
    %v1288 = vmul.f32 %v1287, %v1123
    %v1289 = vmul.f32 %v1207, %v1286
    %v1290 = vadd.f32 %v1288, %v1289
    %s1291 = scalar_lea.vmem [#allocation11], 48
    %1292 = vst [vmem:[%s1291] sm:$0xff] %v1290
    %s1293 = scalar_lea.vmem [#allocation3], 168
    %v1294 = vld [vmem:[%s1293] sm:$0xff]
    %v1295 = vld [vmem:[%s1293 + $0x8] sm:$0xff]
    %v1296 = vld [vmem:[%s1293 + $0x10] sm:$0xff]
    %1297 = vmatprep.subr.mxu0 %v78
    %1298 = vmatpush1.msra.mxu0 %v77
    %1299 = vmatprep.subr.mxu0 %v80
    %1300 = vmatpush1.msra.mxu0 %v79
    %1301 = vmatprep.subr.mxu0 %v82
    %1302 = vmatpush1.msra.mxu0 %v81
    %1303 = vmatprep.subr.mxu0 %v84
    %1304 = vmatpush1.msra.mxu0 %v83
    %1305 = vmatprep.subr.mxu0 %v86
    %1306 = vmatpush1.msra.mxu0 %v85
    %1307 = vmatprep.subr.mxu0 %v88
    %1308 = vmatpush1.msra.mxu0 %v87
    %1309 = vmatprep.subr.mxu0 %v90
    %1310 = vmatpush1.msra.mxu0 %v89
    %1311 = vmatprep.subr.mxu0 %v92
    %1312 = vmatpush1.msra.mxu0 %v91
    %1313 = vmatprep.subr.mxu0 %v94
    %1314 = vmatpush1.msra.mxu0 %v93
    %1315 = vmatprep.subr.mxu0 %v96
    %1316 = vmatpush1.msra.mxu0 %v95
    %1317 = vmatprep.subr.mxu0 %v98
    %1318 = vmatpush1.msra.mxu0 %v97
    %1319 = vmatprep.subr.mxu0 %v100
    %1320 = vmatpush1.msra.mxu0 %v99
    %1321 = vmatprep.subr.mxu0 %v102
    %1322 = vmatpush1.msra.mxu0 %v101
    %1323 = vmatprep.subr.mxu0 %v104
    %1324 = vmatpush1.msra.mxu0 %v103
    %1325 = vmatprep.subr.mxu0 %v106
    %1326 = vmatpush1.msra.mxu0 %v105
    %1327 = vmatprep.subr.mxu0 %v108
    %1328 = vmatpush1.msra.mxu0 %v107
    %1329 = vmatprep.subr.mxu0 0.0
    %1330 = vmatpush1.msra.mxu0 0.0
    %1331 = vmatprep.subr.mxu0 0.0
    %1332 = vmatpush1.msra.mxu0 0.0
    %1333 = vmatprep.subr.mxu0 0.0
    %1334 = vmatpush1.msra.mxu0 0.0
    %1335 = vmatprep.subr.mxu0 0.0
    %1336 = vmatpush1.msra.mxu0 0.0
    %1337 = vmatprep.subr.mxu0 0.0
    %1338 = vmatpush1.msra.mxu0 0.0
    %1339 = vmatprep.subr.mxu0 0.0
    %1340 = vmatpush1.msra.mxu0 0.0
    %1341 = vmatprep.subr.mxu0 0.0
    %1342 = vmatpush1.msra.mxu0 0.0
    %1343 = vmatprep.subr.mxu0 0.0
    %1344 = vmatpush1.msra.mxu0 0.0
    %1345 = vmatprep.subr.mxu0 0.0
    %1346 = vmatpush1.msra.mxu0 0.0
    %1347 = vmatprep.subr.mxu0 0.0
    %1348 = vmatpush1.msra.mxu0 0.0
    %1349 = vmatprep.subr.mxu0 0.0
    %1350 = vmatpush1.msra.mxu0 0.0
    %1351 = vmatprep.subr.mxu0 0.0
    %1352 = vmatpush1.msra.mxu0 0.0
    %1353 = vmatprep.subr.mxu0 0.0
    %1354 = vmatpush1.msra.mxu0 0.0
    %1355 = vmatprep.subr.mxu0 0.0
    %1356 = vmatpush1.msra.mxu0 0.0
    %1357 = vmatprep.subr.mxu0 0.0
    %1358 = vmatpush1.msra.mxu0 0.0
    %1359 = vmatprep.subr.mxu0 0.0
    %1360 = vmatpush1.msra.mxu0 0.0
    %1361 = vmatprep.mubr.f32.mxu0 0.0
    %1362 = vmatmul.mubr.f32.gmra.mrb[0].mxu0 %v1290
    %v1363 = vpop.f32.mrb[0].mxu0
    %v1364 = vadd.f32 0.0, %v1363
    %v1365 = vpop.f32.mrb[0].mxu0
    %v1366 = vadd.f32 0.0, %v1365
    %1367 = vdwg.mxu0
    %v1368 = vadd.f32 %v1364, %v1294
    %v1369 = vxor.u32 %v1368, 2147483648
    %v1370 = vmul.f32 %v1369, 1.442695
    %v1371 = vpow.pop %v1370
    %v1372 = vadd.f32 %v1371, 1.0
    %v1373 = vrcp.pop %v1372
    %v1374 = vmul.f32 1.0, %v1373
    %v1375 = vadd.f32 %v1366, %v1295
    %v1376 = vxor.u32 %v1375, 2147483648
    %v1377 = vmul.f32 %v1376, 1.442695
    %v1378 = vpow.pop %v1377
    %v1379 = vadd.f32 %v1378, 1.0
    %v1380 = vrcp.pop %v1379
    %v1381 = vmul.f32 1.0, %v1380
    %v1382 = vmul.f32 %v1381, %v1290
    %1383 = vmatprep.subr.mxu0 0.0
    %1384 = vmatpush1.msra.mxu0 %v109
    %1385 = vmatprep.subr.mxu0 0.0
    %1386 = vmatpush1.msra.mxu0 %v110
    %1387 = vmatprep.subr.mxu0 0.0
    %1388 = vmatpush1.msra.mxu0 %v111
    %1389 = vmatprep.subr.mxu0 0.0
    %1390 = vmatpush1.msra.mxu0 %v112
    %1391 = vmatprep.subr.mxu0 0.0
    %1392 = vmatpush1.msra.mxu0 %v113
    %1393 = vmatprep.subr.mxu0 0.0
    %1394 = vmatpush1.msra.mxu0 %v114
    %1395 = vmatprep.subr.mxu0 0.0
    %1396 = vmatpush1.msra.mxu0 %v115
    %1397 = vmatprep.subr.mxu0 0.0
    %1398 = vmatpush1.msra.mxu0 %v116
    %1399 = vmatprep.subr.mxu0 0.0
    %1400 = vmatpush1.msra.mxu0 %v117
    %1401 = vmatprep.subr.mxu0 0.0
    %1402 = vmatpush1.msra.mxu0 %v118
    %1403 = vmatprep.subr.mxu0 0.0
    %1404 = vmatpush1.msra.mxu0 %v119
    %1405 = vmatprep.subr.mxu0 0.0
    %1406 = vmatpush1.msra.mxu0 %v120
    %1407 = vmatprep.subr.mxu0 0.0
    %1408 = vmatpush1.msra.mxu0 %v121
    %1409 = vmatprep.subr.mxu0 0.0
    %1410 = vmatpush1.msra.mxu0 %v122
    %1411 = vmatprep.subr.mxu0 0.0
    %1412 = vmatpush1.msra.mxu0 %v123
    %1413 = vmatprep.subr.mxu0 0.0
    %1414 = vmatpush1.msra.mxu0 %v124
    %1415 = vmatprep.subr.mxu0 0.0
    %1416 = vmatpush1.msra.mxu0 0.0
    %1417 = vmatprep.subr.mxu0 0.0
    %1418 = vmatpush1.msra.mxu0 0.0
    %1419 = vmatprep.subr.mxu0 0.0
    %1420 = vmatpush1.msra.mxu0 0.0
    %1421 = vmatprep.subr.mxu0 0.0
    %1422 = vmatpush1.msra.mxu0 0.0
    %1423 = vmatprep.subr.mxu0 0.0
    %1424 = vmatpush1.msra.mxu0 0.0
    %1425 = vmatprep.subr.mxu0 0.0
    %1426 = vmatpush1.msra.mxu0 0.0
    %1427 = vmatprep.subr.mxu0 0.0
    %1428 = vmatpush1.msra.mxu0 0.0
    %1429 = vmatprep.subr.mxu0 0.0
    %1430 = vmatpush1.msra.mxu0 0.0
    %1431 = vmatprep.subr.mxu0 0.0
    %1432 = vmatpush1.msra.mxu0 0.0
    %1433 = vmatprep.subr.mxu0 0.0
    %1434 = vmatpush1.msra.mxu0 0.0
    %1435 = vmatprep.subr.mxu0 0.0
    %1436 = vmatpush1.msra.mxu0 0.0
    %1437 = vmatprep.subr.mxu0 0.0
    %1438 = vmatpush1.msra.mxu0 0.0
    %1439 = vmatprep.subr.mxu0 0.0
    %1440 = vmatpush1.msra.mxu0 0.0
    %1441 = vmatprep.subr.mxu0 0.0
    %1442 = vmatpush1.msra.mxu0 0.0
    %1443 = vmatprep.subr.mxu0 0.0
    %1444 = vmatpush1.msra.mxu0 0.0
    %1445 = vmatprep.subr.mxu0 0.0
    %1446 = vmatpush1.msra.mxu0 0.0
    %1447 = vmatprep.mubr.f32.mxu0 0.0
    %1448 = vmatmul.mubr.f32.gmra.mrb[0].mxu0 %v1382
    %v1449 = vpop.f32.mrb[0].mxu0
    %v1450 = vadd.f32 %v1296, %v1449
    %v1451 = vpop.f32.mrb[0].mxu0
    %1452 = vdwg.mxu0
    %v1453 = vtanh.pop %v1450
    %v1454 = vsub.f32 1.0, %v1374
    %v1455 = vmul.f32 %v1454, %v1290
    %v1456 = vmul.f32 %v1374, %v1453
    %v1457 = vadd.f32 %v1455, %v1456
    %s1458 = scalar_lea.vmem [#allocation11], 56
    %1459 = vst [vmem:[%s1458] sm:$0xff] %v1457
    %1460 = vst [vmem:[#allocation2] sm:$0xff] %v1457
    // Predicated region
    $region38: #{tpu_custom_call.1} parent=1 // pred_check
      _
    $region39: #{tpu_custom_call.1} parent=1 // pred_check_branch
      %1462 = sbr.rel (0) target = $region41
    $region40: #{tpu_custom_call.1} parent=1 // pred_region
      %s1464 = ssub.s32 1024, 1024
      %1465 = vsyncadd [#allocation5], %s1464
      %s1466 = sshll.u32 [#allocation11], 4
      %s1467 = int_to_ptr.vmem [resolvable:$true] %s1466
      %1472 = dma.vmem_to_hbm [thread:$0]  %s1467, 1024, %s4, [#allocation5], 128, 128, 8
    $region41: #{tpu_custom_call.1} parent=1 // pred_fallthru
      _
    // Predicated region
    $region42: #{tpu_custom_call.1} parent=1 // pred_check
      _
    $region43: #{tpu_custom_call.1} parent=1 // pred_check_branch
      %1474 = sbr.rel (0) target = $region45
    $region44: #{tpu_custom_call.1} parent=1 // pred_region
      %1475 = dma.done [#allocation5], 1024
    $region45: #{tpu_custom_call.1} parent=1 // pred_fallthru
      _
    %1476 = vsyncpa [#allocation4], 1
    %1477 = vsyncpa [#allocation7], 1
    %1478 = vsyncpa [#allocation10], 1
    %1479 = vsyncpa [#allocation5], 1

</llo_original>
